<compile_context>
chip_gen: v6e
topology: v6e:2x2x1
jax: 0.10.0
libtpu: 0.0.40
codegen_flags: <defaults>
</compile_context>

<pallas_src>
import math

import jax
import jax.numpy as jnp
from jax.experimental import pallas as pl
from jax.experimental.pallas import tpu as pltpu

WINDOW_SIZE = 11
SIGMA = 1.5
C1 = 0.01 ** 2
C2 = 0.03 ** 2


def _gaussian_window(window_size, sigma):
    center = window_size // 2
    g = [math.exp(-((x - center) ** 2) / (2.0 * sigma ** 2))
         for x in range(window_size)]
    s = sum(g)
    return [v / s for v in g]


_G = _gaussian_window(WINDOW_SIZE, SIGMA)  # deterministic baked-in "weights"


def _band_matrix(n, g, pad):
    # band[i, j] = g[i - j + pad] when |i - j| <= pad, else 0.
    gv = jnp.asarray(g, jnp.float32)
    idx = jnp.arange(n)
    d = idx[:, None] - idx[None, :] + pad
    in_band = (d >= 0) & (d < len(g))
    return jnp.where(in_band, gv[jnp.clip(d, 0, len(g) - 1)],
                     jnp.float32(0.0)).astype(jnp.float32)


def _split_hi_lo(a_f32):
    # f32 -> (hi, lo) bf16 pair; hi + lo carries ~16 mantissa bits.
    hi = a_f32.astype(jnp.bfloat16)
    lo = (a_f32 - hi.astype(jnp.float32)).astype(jnp.bfloat16)
    return hi, lo


def _vmem_capacity_bytes():
    try:
        info = pltpu.get_tpu_info()
        for name in ("vmem_capacity_bytes", "vmem_bytes", "vmem_size_bytes"):
            v = getattr(info, name, None)
            if v:
                return int(v)
    except Exception:
        pass
    return 64 << 20  # conservative default: v7x per-TensorCore VMEM


def _estimate_vmem_bytes(m, w, itemsize):
    # 2 inputs x double-buffered blocks + ~12-16 live f32 (m, w) intermediates
    # + hi/lo bf16 band matrices (charged as double-buffered) + slack.
    return (4 * m * w * itemsize
            + 16 * m * w * 4
            + 16 * (m * m + w * w)
            + (2 << 20))


def _choose_group(bc, h, w, itemsize, budget_bytes, max_rows=None):
    """Channels per grid step.  Keeps blocks sublane-aligned, inside the VMEM
    budget, prefers >= 2 (ideally even) grid steps (megacore on v7x), and for
    large H uses one channel per block to avoid redundant block-diag FLOPs."""
    cap = max_rows if max_rows is not None else 1024
    if h >= 256:
        cap = min(cap, h)
    cands = []
    for d in range(1, bc + 1):
        if bc % d:
            continue
        m = d * h
        if m > cap:
            continue
        if (m % 8 != 0) and (d != bc):   # block == full array is exempt
            continue
        if _estimate_vmem_bytes(m, w, itemsize) > budget_bytes:
            continue
        cands.append(d)
    if not cands:
        # TODO(synk): H-strip tiling with halo so a strip of one channel fits.
        raise ValueError(
            f"No channel grouping fits VMEM (bc={bc}, h={h}, w={w}); "
            "needs H-strip tiling with halo.")

    def pref(d):
        nblk = bc // d
        return (nblk >= 2, nblk >= 2 and nblk % 2 == 0, d)

    return max(cands, key=pref)


def hybrid_loss_kernel(x_ref, y_ref, bwh_ref, bwl_ref, bhh_ref, bhl_ref,
                       out_ref):
    # x/y blocks: (M, W) = G channel-images stacked along the sublane axis.
    x = x_ref[...].astype(jnp.float32)
    y = y_ref[...].astype(jnp.float32)
    bw_hi = bwh_ref[...]   # (W, W) bf16 high part of the width band matrix
    bw_lo = bwl_ref[...]   # (W, W) bf16 low (residual) part
    bh_hi = bhh_ref[...]   # (M, M) bf16 block-diagonal height band (hi)
    bh_lo = bhl_ref[...]   # (M, M) bf16 block-diagonal height band (lo)

    # ---- MSE partial sum (f32 VPU) ----
    diff = x - y
    sum_sq = jnp.sum(diff * diff)

    # ---- Separable Gaussian blur on the MXU: blur(A) = BH @ (A @ BW) ----
    # bf16 operands (single MXU pass each), hi+lo weight split keeps the filter
    # coefficients accurate -> 4 passes/blur vs ~12 for f32 Precision.HIGHEST.
    def blur(a):
        ab = a.astype(jnp.bfloat16)
        t = (jnp.dot(ab, bw_hi, preferred_element_type=jnp.float32)
             + jnp.dot(ab, bw_lo, preferred_element_type=jnp.float32))
        tb = t.astype(jnp.bfloat16)
        return (jnp.dot(bh_hi, tb, preferred_element_type=jnp.float32)
                + jnp.dot(bh_lo, tb, preferred_element_type=jnp.float32))

    # Consume intermediates as soon as they are produced (small live set).
    mu1 = blur(x)
    mu2 = blur(y)
    mu12 = mu1 * mu2
    musq = mu1 * mu1 + mu2 * mu2
    s12 = blur(x * y) - mu12
    num = (2.0 * mu12 + C1) * (2.0 * s12 + C2)
    s_sum = (blur(x * x) + blur(y * y)) - musq
    den = (musq + C1) * (s_sum + C2)
    if hasattr(pl, "reciprocal"):
        inv_den = pl.reciprocal(den, approx=True)   # EUP slot; den > 0
    else:  # very old pallas fallback
        inv_den = 1.0 / den
    sum_ssim = jnp.sum(num * inv_den)

    # ---- lane-dense partial-sum slab: row 0 -> sum(diff^2), row 1 -> sum(ssim)
    row = jax.lax.broadcasted_iota(jnp.int32, (1, 8, 128), 1)
    out_ref[...] = jnp.where(row == 0, sum_sq,
                             jnp.where(row == 1, sum_ssim, jnp.float32(0.0)))


def hybrid_loss(pred, target, window_size=WINDOW_SIZE, max_rows_per_block=None):
    # Match SSIMLoss.forward: promote 3-D (C,H,W) inputs to 4-D.
    if pred.ndim == 3:
        pred = pred[None]
    if target.ndim == 3:
        target = target[None]
    assert pred.shape == target.shape
    B, C, H, W = pred.shape
    pad = window_size // 2
    BC = B * C

    g = _gaussian_window(window_size, SIGMA)

    # Generation-aware VMEM budget: ~72% of physical (v7x: 64 MiB -> ~46 MiB;
    # v5e/v6e: 128 MiB -> ~92 MiB, so bigger blocks are chosen automatically).
    budget = int(_vmem_capacity_bytes() * 0.72)
    itemsize = jnp.dtype(pred.dtype).itemsize

    G = _choose_group(BC, H, W, itemsize, budget, max_rows_per_block)
    M = G * H
    num_blocks = BC // G

    # Free, contiguous reshape: all image rows stacked along the sublane axis.
    x2 = pred.reshape(BC * H, W)
    y2 = target.reshape(BC * H, W)

    # Banded Gaussian matrices (conv zero-padding folded into truncated rows),
    # split into hi/lo bf16 pairs for accurate single-pass MXU matmuls.
    bw = _band_matrix(W, g, pad)                               # (W, W)
    bh = _band_matrix(H, g, pad)                               # (H, H)
    bh_blk = jnp.kron(jnp.eye(G, dtype=jnp.float32), bh)       # (M, M)
    bw_hi, bw_lo = _split_hi_lo(bw)
    bh_hi, bh_lo = _split_hi_lo(bh_blk)

    est = _estimate_vmem_bytes(M, W, itemsize)
    vmem_limit = int(min(budget, max(32 << 20, int(est * 1.25))))

    partials = pl.pallas_call(
        hybrid_loss_kernel,
        out_shape=jax.ShapeDtypeStruct((num_blocks, 8, 128), jnp.float32),
        grid=(num_blocks,),
        in_specs=[
            pl.BlockSpec((M, W), lambda i: (i, 0)),
            pl.BlockSpec((M, W), lambda i: (i, 0)),
            # Constant band matrices (constant index_map -> fetched once).
            # TODO(synk): single-buffer them via pipeline_mode=pl.Buffered(1)
            # once that API is available in the deployed JAX; the VMEM estimate
            # above already charges them as double-buffered.
            pl.BlockSpec((W, W), lambda i: (0, 0)),
            pl.BlockSpec((W, W), lambda i: (0, 0)),
            pl.BlockSpec((M, M), lambda i: (0, 0)),
            pl.BlockSpec((M, M), lambda i: (0, 0)),
        ],
        out_specs=pl.BlockSpec((1, 8, 128), lambda i: (i, 0, 0)),
        compiler_params=pltpu.CompilerParams(
            dimension_semantics=("parallel",),
            vmem_limit_bytes=vmem_limit),
    )(x2, y2, bw_hi, bw_lo, bh_hi, bh_lo)

    n = float(BC * H * W)
    sum_sq = jnp.sum(partials[:, 0, 0])
    sum_ssim = jnp.sum(partials[:, 1, 0])
    return sum_sq / n + (1.0 - sum_ssim / n)


def _reference_hybrid_loss(pred, target, window_size=WINDOW_SIZE):
    # Pure-JAX reference mirroring F.conv2d(zero-pad) semantics, for sanity.
    pad = window_size // 2
    gv = jnp.asarray(_G, jnp.float32)
    win2d = jnp.outer(gv, gv)  # (11, 11)

    def blur(a):
        _, _, H, W = a.shape
        a_pad = jnp.pad(a, ((0, 0), (0, 0), (pad, pad), (pad, pad)))
        out = jnp.zeros_like(a)
        for i in range(window_size):
            for j in range(window_size):
                out = out + win2d[i, j] * a_pad[:, :, i:i + H, j:j + W]
        return out

    pred = pred.astype(jnp.float32)
    target = target.astype(jnp.float32)
    mse = jnp.mean((pred - target) ** 2)
    mu1, mu2 = blur(pred), blur(target)
    s1 = blur(pred * pred) - mu1 * mu1
    s2 = blur(target * target) - mu2 * mu2
    s12 = blur(pred * target) - mu1 * mu2
    ssim_map = ((2 * mu1 * mu2 + C1) * (2 * s12 + C2)) / \
               ((mu1 * mu1 + mu2 * mu2 + C1) * (s1 + s2 + C2))
    return mse + (1.0 - jnp.mean(ssim_map))


if __name__ == "__main__":
    key = jax.random.PRNGKey(0)
    k1, k2, k3, k4 = jax.random.split(key, 4)

    # Primary small shape (2 grid steps -> exercises the parallel grid axis).
    B, C, H, W = 2, 4, 16, 16
    pred = jax.random.uniform(k1, (B, C, H, W), dtype=jnp.float32)
    target = jax.random.uniform(k2, (B, C, H, W), dtype=jnp.float32)
    loss = jax.block_until_ready(hybrid_loss(pred, target))
    ref = _reference_hybrid_loss(pred, target)
    # Tolerance covers bf16 MXU operand quantization vs the f32 VPU reference.
    assert jnp.allclose(loss, ref, rtol=2e-3, atol=2e-3), (loss, ref)

    # Second shape with a forced small row budget -> multi-step grid, exercises
    # the per-block partial-sum path and non-square / non-divisor-of-128 W.
    B2, C2, H2, W2 = 2, 3, 16, 40
    pred2 = jax.random.uniform(k3, (B2, C2, H2, W2), dtype=jnp.float32)
    target2 = jax.random.uniform(k4, (B2, C2, H2, W2), dtype=jnp.float32)
    loss2 = jax.block_until_ready(
        hybrid_loss(pred2, target2, max_rows_per_block=32))
    ref2 = _reference_hybrid_loss(pred2, target2)
    assert jnp.allclose(loss2, ref2, rtol=2e-3, atol=2e-3), (loss2, ref2)

    print("KERNEL_OK")
</pallas_src>

<mosaic_0001>
module attributes {stable_mosaic.version = 11 : i64} {
  func.func @hybrid_loss_kernel(%arg0: i32, %arg1: memref<64x16xf32, #tpu.memory_space<vmem>>, %arg2: memref<64x16xf32, #tpu.memory_space<vmem>>, %arg3: memref<16x16xbf16, #tpu.memory_space<vmem>>, %arg4: memref<16x16xbf16, #tpu.memory_space<vmem>>, %arg5: memref<64x64xbf16, #tpu.memory_space<vmem>>, %arg6: memref<64x64xbf16, #tpu.memory_space<vmem>>, %arg7: memref<1x8x128xf32, #tpu.memory_space<vmem>>) attributes {dimension_semantics = [#tpu.dimension_semantics<parallel>], iteration_bounds = array<i64: 2>, scalar_prefetch = 0 : i64, scratch_operands = 0 : i64, tpu.core_type = #tpu.core_type<tc>, window_params = [{transform_indices = @transform_0, window_bounds = array<i64: 64, 16>}, {transform_indices = @transform_1, window_bounds = array<i64: 64, 16>}, {pipeline_mode = #tpu.pipeline_mode<synchronous>, transform_indices = @transform_2, window_bounds = array<i64: 16, 16>}, {pipeline_mode = #tpu.pipeline_mode<synchronous>, transform_indices = @transform_3, window_bounds = array<i64: 16, 16>}, {pipeline_mode = #tpu.pipeline_mode<synchronous>, transform_indices = @transform_4, window_bounds = array<i64: 64, 64>}, {pipeline_mode = #tpu.pipeline_mode<synchronous>, transform_indices = @transform_5, window_bounds = array<i64: 64, 64>}, {transform_indices = @transform_6, window_bounds = array<i64: 1, 8, 128>}]} {
    %c0 = arith.constant 0 : index
    %c0_0 = arith.constant 0 : index
    %0 = vector.load %arg1[%c0, %c0_0] : memref<64x16xf32, #tpu.memory_space<vmem>>, vector<64x16xf32>
    %c0_1 = arith.constant 0 : index
    %c0_2 = arith.constant 0 : index
    %1 = vector.load %arg2[%c0_1, %c0_2] : memref<64x16xf32, #tpu.memory_space<vmem>>, vector<64x16xf32>
    %c0_3 = arith.constant 0 : index
    %c0_4 = arith.constant 0 : index
    %2 = vector.load %arg3[%c0_3, %c0_4] : memref<16x16xbf16, #tpu.memory_space<vmem>>, vector<16x16xbf16>
    %c0_5 = arith.constant 0 : index
    %c0_6 = arith.constant 0 : index
    %3 = vector.load %arg4[%c0_5, %c0_6] : memref<16x16xbf16, #tpu.memory_space<vmem>>, vector<16x16xbf16>
    %c0_7 = arith.constant 0 : index
    %c0_8 = arith.constant 0 : index
    %4 = vector.load %arg5[%c0_7, %c0_8] : memref<64x64xbf16, #tpu.memory_space<vmem>>, vector<64x64xbf16>
    %c0_9 = arith.constant 0 : index
    %c0_10 = arith.constant 0 : index
    %5 = vector.load %arg6[%c0_9, %c0_10] : memref<64x64xbf16, #tpu.memory_space<vmem>>, vector<64x64xbf16>
    %6 = arith.subf %0, %1 : vector<64x16xf32>
    %7 = arith.mulf %6, %6 : vector<64x16xf32>
    %8 = vector.shape_cast %7 : vector<64x16xf32> to vector<1x64x16xf32>
    %cst = arith.constant dense<0.000000e+00> : vector<1xf32>
    %9 = vector.multi_reduction <add>, %8, %cst [1, 2] : vector<1x64x16xf32> to vector<1xf32>
    %10 = vector.shape_cast %9 : vector<1xf32> to vector<1x1x1xf32>
    %11 = vector.extract %10[0, 0, 0] : f32 from vector<1x1x1xf32>
    %12 = arith.truncf %0 : vector<64x16xf32> to vector<64x16xbf16>
    %cst_11 = arith.constant dense<0.000000e+00> : vector<64x16xf32>
    %13 = tpu.matmul %12, %2, %cst_11 {dimension_numbers = #tpu.dot_dimension_numbers<[1], [0], [0], [1], [0, 0, 1, 1], [], []>} : vector<64x16xbf16>, vector<16x16xbf16>, vector<64x16xf32> -> vector<64x16xf32>
    %cst_12 = arith.constant dense<0.000000e+00> : vector<64x16xf32>
    %14 = tpu.matmul %12, %3, %cst_12 {dimension_numbers = #tpu.dot_dimension_numbers<[1], [0], [0], [1], [0, 0, 1, 1], [], []>} : vector<64x16xbf16>, vector<16x16xbf16>, vector<64x16xf32> -> vector<64x16xf32>
    %15 = arith.addf %13, %14 : vector<64x16xf32>
    %16 = arith.truncf %15 : vector<64x16xf32> to vector<64x16xbf16>
    %cst_13 = arith.constant dense<0.000000e+00> : vector<64x16xf32>
    %17 = tpu.matmul %4, %16, %cst_13 {dimension_numbers = #tpu.dot_dimension_numbers<[1], [0], [0], [1], [0, 0, 1, 1], [], []>} : vector<64x64xbf16>, vector<64x16xbf16>, vector<64x16xf32> -> vector<64x16xf32>
    %cst_14 = arith.constant dense<0.000000e+00> : vector<64x16xf32>
    %18 = tpu.matmul %5, %16, %cst_14 {dimension_numbers = #tpu.dot_dimension_numbers<[1], [0], [0], [1], [0, 0, 1, 1], [], []>} : vector<64x64xbf16>, vector<64x16xbf16>, vector<64x16xf32> -> vector<64x16xf32>
    %19 = arith.addf %17, %18 : vector<64x16xf32>
    %20 = arith.truncf %1 : vector<64x16xf32> to vector<64x16xbf16>
    %cst_15 = arith.constant dense<0.000000e+00> : vector<64x16xf32>
    %21 = tpu.matmul %20, %2, %cst_15 {dimension_numbers = #tpu.dot_dimension_numbers<[1], [0], [0], [1], [0, 0, 1, 1], [], []>} : vector<64x16xbf16>, vector<16x16xbf16>, vector<64x16xf32> -> vector<64x16xf32>
    %cst_16 = arith.constant dense<0.000000e+00> : vector<64x16xf32>
    %22 = tpu.matmul %20, %3, %cst_16 {dimension_numbers = #tpu.dot_dimension_numbers<[1], [0], [0], [1], [0, 0, 1, 1], [], []>} : vector<64x16xbf16>, vector<16x16xbf16>, vector<64x16xf32> -> vector<64x16xf32>
    %23 = arith.addf %21, %22 : vector<64x16xf32>
    %24 = arith.truncf %23 : vector<64x16xf32> to vector<64x16xbf16>
    %cst_17 = arith.constant dense<0.000000e+00> : vector<64x16xf32>
    %25 = tpu.matmul %4, %24, %cst_17 {dimension_numbers = #tpu.dot_dimension_numbers<[1], [0], [0], [1], [0, 0, 1, 1], [], []>} : vector<64x64xbf16>, vector<64x16xbf16>, vector<64x16xf32> -> vector<64x16xf32>
    %cst_18 = arith.constant dense<0.000000e+00> : vector<64x16xf32>
    %26 = tpu.matmul %5, %24, %cst_18 {dimension_numbers = #tpu.dot_dimension_numbers<[1], [0], [0], [1], [0, 0, 1, 1], [], []>} : vector<64x64xbf16>, vector<64x16xbf16>, vector<64x16xf32> -> vector<64x16xf32>
    %27 = arith.addf %25, %26 : vector<64x16xf32>
    %28 = arith.mulf %19, %27 : vector<64x16xf32>
    %29 = arith.mulf %19, %19 : vector<64x16xf32>
    %30 = arith.mulf %27, %27 : vector<64x16xf32>
    %31 = arith.addf %29, %30 : vector<64x16xf32>
    %32 = arith.mulf %0, %1 : vector<64x16xf32>
    %33 = arith.truncf %32 : vector<64x16xf32> to vector<64x16xbf16>
    %cst_19 = arith.constant dense<0.000000e+00> : vector<64x16xf32>
    %34 = tpu.matmul %33, %2, %cst_19 {dimension_numbers = #tpu.dot_dimension_numbers<[1], [0], [0], [1], [0, 0, 1, 1], [], []>} : vector<64x16xbf16>, vector<16x16xbf16>, vector<64x16xf32> -> vector<64x16xf32>
    %cst_20 = arith.constant dense<0.000000e+00> : vector<64x16xf32>
    %35 = tpu.matmul %33, %3, %cst_20 {dimension_numbers = #tpu.dot_dimension_numbers<[1], [0], [0], [1], [0, 0, 1, 1], [], []>} : vector<64x16xbf16>, vector<16x16xbf16>, vector<64x16xf32> -> vector<64x16xf32>
    %36 = arith.addf %34, %35 : vector<64x16xf32>
    %37 = arith.truncf %36 : vector<64x16xf32> to vector<64x16xbf16>
    %cst_21 = arith.constant dense<0.000000e+00> : vector<64x16xf32>
    %38 = tpu.matmul %4, %37, %cst_21 {dimension_numbers = #tpu.dot_dimension_numbers<[1], [0], [0], [1], [0, 0, 1, 1], [], []>} : vector<64x64xbf16>, vector<64x16xbf16>, vector<64x16xf32> -> vector<64x16xf32>
    %cst_22 = arith.constant dense<0.000000e+00> : vector<64x16xf32>
    %39 = tpu.matmul %5, %37, %cst_22 {dimension_numbers = #tpu.dot_dimension_numbers<[1], [0], [0], [1], [0, 0, 1, 1], [], []>} : vector<64x64xbf16>, vector<64x16xbf16>, vector<64x16xf32> -> vector<64x16xf32>
    %40 = arith.addf %38, %39 : vector<64x16xf32>
    %41 = arith.subf %40, %28 : vector<64x16xf32>
    %cst_23 = arith.constant 2.000000e+00 : f32
    %42 = vector.broadcast %cst_23 : f32 to vector<64x16xf32>
    %43 = arith.mulf %42, %28 : vector<64x16xf32>
    %cst_24 = arith.constant 9.99999974E-5 : f32
    %44 = vector.broadcast %cst_24 : f32 to vector<64x16xf32>
    %45 = arith.addf %43, %44 : vector<64x16xf32>
    %cst_25 = arith.constant 2.000000e+00 : f32
    %46 = vector.broadcast %cst_25 : f32 to vector<64x16xf32>
    %47 = arith.mulf %46, %41 : vector<64x16xf32>
    %cst_26 = arith.constant 8.99999984E-4 : f32
    %48 = vector.broadcast %cst_26 : f32 to vector<64x16xf32>
    %49 = arith.addf %47, %48 : vector<64x16xf32>
    %50 = arith.mulf %45, %49 : vector<64x16xf32>
    %51 = arith.mulf %0, %0 : vector<64x16xf32>
    %52 = arith.truncf %51 : vector<64x16xf32> to vector<64x16xbf16>
    %cst_27 = arith.constant dense<0.000000e+00> : vector<64x16xf32>
    %53 = tpu.matmul %52, %2, %cst_27 {dimension_numbers = #tpu.dot_dimension_numbers<[1], [0], [0], [1], [0, 0, 1, 1], [], []>} : vector<64x16xbf16>, vector<16x16xbf16>, vector<64x16xf32> -> vector<64x16xf32>
    %cst_28 = arith.constant dense<0.000000e+00> : vector<64x16xf32>
    %54 = tpu.matmul %52, %3, %cst_28 {dimension_numbers = #tpu.dot_dimension_numbers<[1], [0], [0], [1], [0, 0, 1, 1], [], []>} : vector<64x16xbf16>, vector<16x16xbf16>, vector<64x16xf32> -> vector<64x16xf32>
    %55 = arith.addf %53, %54 : vector<64x16xf32>
    %56 = arith.truncf %55 : vector<64x16xf32> to vector<64x16xbf16>
    %cst_29 = arith.constant dense<0.000000e+00> : vector<64x16xf32>
    %57 = tpu.matmul %4, %56, %cst_29 {dimension_numbers = #tpu.dot_dimension_numbers<[1], [0], [0], [1], [0, 0, 1, 1], [], []>} : vector<64x64xbf16>, vector<64x16xbf16>, vector<64x16xf32> -> vector<64x16xf32>
    %cst_30 = arith.constant dense<0.000000e+00> : vector<64x16xf32>
    %58 = tpu.matmul %5, %56, %cst_30 {dimension_numbers = #tpu.dot_dimension_numbers<[1], [0], [0], [1], [0, 0, 1, 1], [], []>} : vector<64x64xbf16>, vector<64x16xbf16>, vector<64x16xf32> -> vector<64x16xf32>
    %59 = arith.addf %57, %58 : vector<64x16xf32>
    %60 = arith.mulf %1, %1 : vector<64x16xf32>
    %61 = arith.truncf %60 : vector<64x16xf32> to vector<64x16xbf16>
    %cst_31 = arith.constant dense<0.000000e+00> : vector<64x16xf32>
    %62 = tpu.matmul %61, %2, %cst_31 {dimension_numbers = #tpu.dot_dimension_numbers<[1], [0], [0], [1], [0, 0, 1, 1], [], []>} : vector<64x16xbf16>, vector<16x16xbf16>, vector<64x16xf32> -> vector<64x16xf32>
    %cst_32 = arith.constant dense<0.000000e+00> : vector<64x16xf32>
    %63 = tpu.matmul %61, %3, %cst_32 {dimension_numbers = #tpu.dot_dimension_numbers<[1], [0], [0], [1], [0, 0, 1, 1], [], []>} : vector<64x16xbf16>, vector<16x16xbf16>, vector<64x16xf32> -> vector<64x16xf32>
    %64 = arith.addf %62, %63 : vector<64x16xf32>
    %65 = arith.truncf %64 : vector<64x16xf32> to vector<64x16xbf16>
    %cst_33 = arith.constant dense<0.000000e+00> : vector<64x16xf32>
    %66 = tpu.matmul %4, %65, %cst_33 {dimension_numbers = #tpu.dot_dimension_numbers<[1], [0], [0], [1], [0, 0, 1, 1], [], []>} : vector<64x64xbf16>, vector<64x16xbf16>, vector<64x16xf32> -> vector<64x16xf32>
    %cst_34 = arith.constant dense<0.000000e+00> : vector<64x16xf32>
    %67 = tpu.matmul %5, %65, %cst_34 {dimension_numbers = #tpu.dot_dimension_numbers<[1], [0], [0], [1], [0, 0, 1, 1], [], []>} : vector<64x64xbf16>, vector<64x16xbf16>, vector<64x16xf32> -> vector<64x16xf32>
    %68 = arith.addf %66, %67 : vector<64x16xf32>
    %69 = arith.addf %59, %68 : vector<64x16xf32>
    %70 = arith.subf %69, %31 : vector<64x16xf32>
    %cst_35 = arith.constant 9.99999974E-5 : f32
    %71 = vector.broadcast %cst_35 : f32 to vector<64x16xf32>
    %72 = arith.addf %31, %71 : vector<64x16xf32>
    %cst_36 = arith.constant 8.99999984E-4 : f32
    %73 = vector.broadcast %cst_36 : f32 to vector<64x16xf32>
    %74 = arith.addf %70, %73 : vector<64x16xf32>
    %75 = arith.mulf %72, %74 : vector<64x16xf32>
    %76 = tpu.reciprocal %75 {approx = true} : vector<64x16xf32> -> vector<64x16xf32>
    %77 = arith.mulf %50, %76 : vector<64x16xf32>
    %78 = vector.shape_cast %77 : vector<64x16xf32> to vector<1x64x16xf32>
    %cst_37 = arith.constant dense<0.000000e+00> : vector<1xf32>
    %79 = vector.multi_reduction <add>, %78, %cst_37 [1, 2] : vector<1x64x16xf32> to vector<1xf32>
    %80 = vector.shape_cast %79 : vector<1xf32> to vector<1x1x1xf32>
    %81 = vector.extract %80[0, 0, 0] : f32 from vector<1x1x1xf32>
    %82 = tpu.iota {dimensions = array<i32: 1>} : vector<1x8x128xi32>
    %c0_i32 = arith.constant 0 : i32
    %83 = vector.broadcast %c0_i32 : i32 to vector<1x8x128xi32>
    %84 = arith.cmpi eq, %82, %83 : vector<1x8x128xi32>
    %c1_i32 = arith.constant 1 : i32
    %85 = vector.broadcast %c1_i32 : i32 to vector<1x8x128xi32>
    %86 = arith.cmpi eq, %82, %85 : vector<1x8x128xi32>
    %cst_38 = arith.constant 0.000000e+00 : f32
    %87 = vector.broadcast %81 : f32 to vector<1x8x128xf32>
    %88 = vector.broadcast %cst_38 : f32 to vector<1x8x128xf32>
    %89 = arith.select %86, %87, %88 : vector<1x8x128xi1>, vector<1x8x128xf32>
    %90 = vector.broadcast %11 : f32 to vector<1x8x128xf32>
    %91 = arith.select %84, %90, %89 : vector<1x8x128xi1>, vector<1x8x128xf32>
    %c0_39 = arith.constant 0 : index
    %c0_40 = arith.constant 0 : index
    %c0_41 = arith.constant 0 : index
    %92 = vector.load %arg7[%c0_39, %c0_40, %c0_41] : memref<1x8x128xf32, #tpu.memory_space<vmem>>, vector<1x8x128xf32>
    tpu.vector_store %arg7[%c0_39, %c0_40, %c0_41], %91 {strides = array<i32>} : memref<1x8x128xf32, #tpu.memory_space<vmem>>, vector<1x8x128xf32>,
    return
  }
  func.func @transform_0(%arg0: i32) -> (i32, i32) {
    %c0_i32 = arith.constant 0 : i32
    %c0_i32_0 = arith.constant 0 : i32
    return %arg0, %c0_i32 : i32, i32
  }
  func.func @transform_1(%arg0: i32) -> (i32, i32) {
    %c0_i32 = arith.constant 0 : i32
    %c0_i32_0 = arith.constant 0 : i32
    return %arg0, %c0_i32 : i32, i32
  }
  func.func @transform_2(%arg0: i32) -> (i32, i32) {
    %c0_i32 = arith.constant 0 : i32
    %c0_i32_0 = arith.constant 0 : i32
    %c0_i32_1 = arith.constant 0 : i32
    return %c0_i32, %c0_i32_0 : i32, i32
  }
  func.func @transform_3(%arg0: i32) -> (i32, i32) {
    %c0_i32 = arith.constant 0 : i32
    %c0_i32_0 = arith.constant 0 : i32
    %c0_i32_1 = arith.constant 0 : i32
    return %c0_i32, %c0_i32_0 : i32, i32
  }
  func.func @transform_4(%arg0: i32) -> (i32, i32) {
    %c0_i32 = arith.constant 0 : i32
    %c0_i32_0 = arith.constant 0 : i32
    %c0_i32_1 = arith.constant 0 : i32
    return %c0_i32, %c0_i32_0 : i32, i32
  }
  func.func @transform_5(%arg0: i32) -> (i32, i32) {
    %c0_i32 = arith.constant 0 : i32
    %c0_i32_0 = arith.constant 0 : i32
    %c0_i32_1 = arith.constant 0 : i32
    return %c0_i32, %c0_i32_0 : i32, i32
  }
  func.func @transform_6(%arg0: i32) -> (i32, i32, i32) {
    %c0_i32 = arith.constant 0 : i32
    %c0_i32_0 = arith.constant 0 : i32
    %c0_i32_1 = arith.constant 0 : i32
    return %arg0, %c0_i32, %c0_i32_0 : i32, i32, i32
  }
}

</mosaic_0001>

<llo_original>
// kernel: tpu_custom_call.1
$region0: #{tpu_custom_call.1}
  #allocation0 [shape = 'u32[]', space=smem, size = 0x4, offset = 0x4, fixed_abs, tag = 'smem constant byte address 0x4 - core index']
  #allocation1 [shape = 'u32[144,128]{1,0:T(1,128)}', space=vmem, size = 0x12000, scoped, tag = 'internal scratch']
  %s0 = inlined_call_operand.vmem [shape: f32[128,16], index: 0, kind: input, shape index: {}]
  %s1 = inlined_call_operand.vmem [shape: f32[128,16], index: 1, kind: input, shape index: {}]
  %s2 = inlined_call_operand.vmem [shape: bf16[16,16], index: 2, kind: input, shape index: {}]
  %s3 = inlined_call_operand.vmem [shape: bf16[16,16], index: 3, kind: input, shape index: {}]
  %s4 = inlined_call_operand.vmem [shape: bf16[64,64], index: 4, kind: input, shape index: {}]
  %s5 = inlined_call_operand.vmem [shape: bf16[64,64], index: 5, kind: input, shape index: {}]
  %s6 = inlined_call_operand.hbm [shape: f32[2,8,128], index: 6, kind: output, shape index: {}]
  %s7 = sld [smem:[#allocation0]]
  $region57: #{tpu_custom_call.1} parent=0
    _
  %s9 = ssub.s32 1, %s7
  %s10 = scalar_select 0, %s9, %s7
  $region1: #{tpu_custom_call.1} parent=0
    #allocation2 [shape = 'u8[8192]{0}', space=vmem, size = 0x2000, scoped, tag = 'output window, operand 0']
    #allocation3 [shape = 's32[2]{0}', space=sflag, size = 0x8, scoped, tag = 'scoped memory for tpu_custom_call.1']
    %11 = vsyncpa [#allocation3], 0
    %s12 = scalar_lea.sflag [#allocation3], 1
    %13 = vsyncpa %s12, 0
    loop: start=0, step=1, limit=4
    $region2: #{tpu_custom_call.1} parent=1 // loop_pre_header
      _
    $region3: #{tpu_custom_call.1} parent=1 // loop_header
      %s15 = sphi 0, %s19
      %p16 = scmp.ge.s32.totalorder %s15, 4
      %s25 = sphi 0, %s27
      %s28 = sphi 0, %s25
      %s29 = sphi 0, %s28
      %s45 = sphi 0, %s29
      %s51 = sphi 0, %s53
      %s54 = sphi 0, %s51
      %s55 = sphi 0, %s54
      %s71 = sphi 0, %s55
      %s75 = sphi 0, %s75
      %s77 = sphi 0, %s75
      %s78 = sphi 0, %s77
      %s92 = sphi 0, %s78
      %s96 = sphi 0, %s96
      %s98 = sphi 0, %s96
      %s99 = sphi 0, %s98
      %s113 = sphi 0, %s99
      %s117 = sphi 0, %s117
      %s119 = sphi 0, %s117
      %s120 = sphi 0, %s119
      %s134 = sphi 0, %s120
      %s138 = sphi 0, %s138
      %s140 = sphi 0, %s138
      %s141 = sphi 0, %s140
      %s155 = sphi 0, %s141
      %s161 = sphi 0, %s163
      %s164 = sphi 0, %s161
      %s165 = sphi 0, %s164
      %s181 = sphi 0, %s165
    $region4: #{tpu_custom_call.1} parent=1 // loop_header_branch
      %18 = sbr.rel (%p16) target = $region8
    $region5: #{tpu_custom_call.1} parent=1 // loop_body
      %s20 = ssub.s32 %s15, 1
      %s21 = ssub.s32 %s15, 2
      %s22 = sadd.s32 %s15, 1
      %s23 = ssub.s32 %s15, %s22
      %p24 = scmp.eq.s32.totalorder %s23, 0
      %s26 = sadd.s32 %s25, 1
      %s27 = scalar_select %p24, %s25, %s26
      %p30 = pneg %p24
      %p31 = scmp.eq.s32.totalorder %s15, 1
      %p32 = por %p30, %p31
      %p33 = scmp.ne.s32.totalorder %s25, %s28
      %p34 = scmp.eq.s32.totalorder %s15, 0
      %p35 = por %p33, %p34
      %p36 = scmp.ne.s32.totalorder %s25, %s28
      %p37 = scmp.eq.s32.totalorder %s20, 1
      %p38 = por %p36, %p37
      %p39 = scmp.ne.s32.totalorder %s28, %s29
      %p40 = scmp.eq.s32.totalorder %s20, 0
      %p41 = por %p39, %p40
      %p42 = scmp.ne.s32.totalorder %s28, %s29
      %p43 = scmp.eq.s32.totalorder %s21, 1
      %p44 = por %p42, %p43
      %p46 = scmp.ne.s32.totalorder %s29, %s45
      %p47 = scmp.eq.s32.totalorder %s21, 0
      %p48 = por %p46, %p47
      %s49 = ssub.s32 %s15, %s22
      %p50 = scmp.eq.s32.totalorder %s49, 0
      %s52 = sadd.s32 %s51, 1
      %s53 = scalar_select %p50, %s51, %s52
      %p56 = pneg %p50
      %p57 = scmp.eq.s32.totalorder %s15, 1
      %p58 = por %p56, %p57
      %p59 = scmp.ne.s32.totalorder %s51, %s54
      %p60 = scmp.eq.s32.totalorder %s15, 0
      %p61 = por %p59, %p60
      %p62 = scmp.ne.s32.totalorder %s51, %s54
      %p63 = scmp.eq.s32.totalorder %s20, 1
      %p64 = por %p62, %p63
      %p65 = scmp.ne.s32.totalorder %s54, %s55
      %p66 = scmp.eq.s32.totalorder %s20, 0
      %p67 = por %p65, %p66
      %p68 = scmp.ne.s32.totalorder %s54, %s55
      %p69 = scmp.eq.s32.totalorder %s21, 1
      %p70 = por %p68, %p69
      %p72 = scmp.ne.s32.totalorder %s55, %s71
      %p73 = scmp.eq.s32.totalorder %s21, 0
      %p74 = por %p72, %p73
      %s76 = sadd.s32 %s75, 1
      %p79 = scmp.eq.s32.totalorder %s15, 1
      %p80 = scmp.ne.s32.totalorder %s75, %s77
      %p81 = scmp.eq.s32.totalorder %s15, 0
      %p82 = por %p80, %p81
      %p83 = scmp.ne.s32.totalorder %s75, %s77
      %p84 = scmp.eq.s32.totalorder %s20, 1
      %p85 = por %p83, %p84
      %p86 = scmp.ne.s32.totalorder %s77, %s78
      %p87 = scmp.eq.s32.totalorder %s20, 0
      %p88 = por %p86, %p87
      %p89 = scmp.ne.s32.totalorder %s77, %s78
      %p90 = scmp.eq.s32.totalorder %s21, 1
      %p91 = por %p89, %p90
      %p93 = scmp.ne.s32.totalorder %s78, %s92
      %p94 = scmp.eq.s32.totalorder %s21, 0
      %p95 = por %p93, %p94
      %s97 = sadd.s32 %s96, 1
      %p100 = scmp.eq.s32.totalorder %s15, 1
      %p101 = scmp.ne.s32.totalorder %s96, %s98
      %p102 = scmp.eq.s32.totalorder %s15, 0
      %p103 = por %p101, %p102
      %p104 = scmp.ne.s32.totalorder %s96, %s98
      %p105 = scmp.eq.s32.totalorder %s20, 1
      %p106 = por %p104, %p105
      %p107 = scmp.ne.s32.totalorder %s98, %s99
      %p108 = scmp.eq.s32.totalorder %s20, 0
      %p109 = por %p107, %p108
      %p110 = scmp.ne.s32.totalorder %s98, %s99
      %p111 = scmp.eq.s32.totalorder %s21, 1
      %p112 = por %p110, %p111
      %p114 = scmp.ne.s32.totalorder %s99, %s113
      %p115 = scmp.eq.s32.totalorder %s21, 0
      %p116 = por %p114, %p115
      %s118 = sadd.s32 %s117, 1
      %p121 = scmp.eq.s32.totalorder %s15, 1
      %p122 = scmp.ne.s32.totalorder %s117, %s119
      %p123 = scmp.eq.s32.totalorder %s15, 0
      %p124 = por %p122, %p123
      %p125 = scmp.ne.s32.totalorder %s117, %s119
      %p126 = scmp.eq.s32.totalorder %s20, 1
      %p127 = por %p125, %p126
      %p128 = scmp.ne.s32.totalorder %s119, %s120
      %p129 = scmp.eq.s32.totalorder %s20, 0
      %p130 = por %p128, %p129
      %p131 = scmp.ne.s32.totalorder %s119, %s120
      %p132 = scmp.eq.s32.totalorder %s21, 1
      %p133 = por %p131, %p132
      %p135 = scmp.ne.s32.totalorder %s120, %s134
      %p136 = scmp.eq.s32.totalorder %s21, 0
      %p137 = por %p135, %p136
      %s139 = sadd.s32 %s138, 1
      %p142 = scmp.eq.s32.totalorder %s15, 1
      %p143 = scmp.ne.s32.totalorder %s138, %s140
      %p144 = scmp.eq.s32.totalorder %s15, 0
      %p145 = por %p143, %p144
      %p146 = scmp.ne.s32.totalorder %s138, %s140
      %p147 = scmp.eq.s32.totalorder %s20, 1
      %p148 = por %p146, %p147
      %p149 = scmp.ne.s32.totalorder %s140, %s141
      %p150 = scmp.eq.s32.totalorder %s20, 0
      %p151 = por %p149, %p150
      %p152 = scmp.ne.s32.totalorder %s140, %s141
      %p153 = scmp.eq.s32.totalorder %s21, 1
      %p154 = por %p152, %p153
      %p156 = scmp.ne.s32.totalorder %s141, %s155
      %p157 = scmp.eq.s32.totalorder %s21, 0
      %p158 = por %p156, %p157
      %s159 = ssub.s32 %s15, %s22
      %p160 = scmp.eq.s32.totalorder %s159, 0
      %s162 = sadd.s32 %s161, 1
      %s163 = scalar_select %p160, %s161, %s162
      %p166 = pneg %p160
      %p167 = scmp.eq.s32.totalorder %s15, 1
      %p168 = por %p166, %p167
      %p169 = scmp.ne.s32.totalorder %s161, %s164
      %p170 = scmp.eq.s32.totalorder %s15, 0
      %p171 = por %p169, %p170
      %p172 = scmp.ne.s32.totalorder %s161, %s164
      %p173 = scmp.eq.s32.totalorder %s20, 1
      %p174 = por %p172, %p173
      %p175 = scmp.ne.s32.totalorder %s164, %s165
      %p176 = scmp.eq.s32.totalorder %s20, 0
      %p177 = por %p175, %p176
      %p178 = scmp.ne.s32.totalorder %s164, %s165
      %p179 = scmp.eq.s32.totalorder %s21, 1
      %p180 = por %p178, %p179
      %p182 = scmp.ne.s32.totalorder %s165, %s181
      %p183 = scmp.eq.s32.totalorder %s21, 0
      %p184 = por %p182, %p183
      %p185 = scmp.le.s32.totalorder 1, %s15
      %p186 = scmp.lt.s32.totalorder %s15, 3
      %p187 = pnand %p185, %p186
      %p188 = pneg %p187
      // Predicated region
      $region9: #{tpu_custom_call.1} parent=5 // pred_check
        _
      $region10: #{tpu_custom_call.1} parent=5 // pred_check_branch
        %190 = sbr.rel (%p187) target = $region12
      $region11: #{tpu_custom_call.1} parent=5 // pred_region
        %s191 = ssub.s32 %s15, 1
        // Predicated region
        $region13: #{tpu_custom_call.1} parent=11 // pred_check
          %p192 = pneg %p88
        $region14: #{tpu_custom_call.1} parent=11 // pred_check_branch
          %194 = sbr.rel (%p192) target = $region16
        $region15: #{tpu_custom_call.1} parent=11 // pred_region
          _
        $region16: #{tpu_custom_call.1} parent=11 // pred_fallthru
          _
        // Predicated region
        $region17: #{tpu_custom_call.1} parent=11 // pred_check
          %p195 = pneg %p109
        $region18: #{tpu_custom_call.1} parent=11 // pred_check_branch
          %197 = sbr.rel (%p195) target = $region20
        $region19: #{tpu_custom_call.1} parent=11 // pred_region
          _
        $region20: #{tpu_custom_call.1} parent=11 // pred_fallthru
          _
        // Predicated region
        $region21: #{tpu_custom_call.1} parent=11 // pred_check
          %p198 = pneg %p130
        $region22: #{tpu_custom_call.1} parent=11 // pred_check_branch
          %200 = sbr.rel (%p198) target = $region24
        $region23: #{tpu_custom_call.1} parent=11 // pred_region
          _
        $region24: #{tpu_custom_call.1} parent=11 // pred_fallthru
          _
        // Predicated region
        $region25: #{tpu_custom_call.1} parent=11 // pred_check
          %p201 = pneg %p151
        $region26: #{tpu_custom_call.1} parent=11 // pred_check_branch
          %203 = sbr.rel (%p201) target = $region28
        $region27: #{tpu_custom_call.1} parent=11 // pred_region
          _
        $region28: #{tpu_custom_call.1} parent=11 // pred_fallthru
          _
      $region12: #{tpu_custom_call.1} parent=5 // pred_fallthru
        _
      %p204 = scmp.lt.s32.totalorder %s15, 2
      // Predicated region
      $region29: #{tpu_custom_call.1} parent=5 // pred_check
        %p205 = pneg %p204
      $region30: #{tpu_custom_call.1} parent=5 // pred_check_branch
        %207 = sbr.rel (%p205) target = $region32
      $region31: #{tpu_custom_call.1} parent=5 // pred_region
        // Predicated region
        $region33: #{tpu_custom_call.1} parent=31 // pred_check
          %p208 = pneg %p35
        $region34: #{tpu_custom_call.1} parent=31 // pred_check_branch
          %210 = sbr.rel (%p208) target = $region36
        $region35: #{tpu_custom_call.1} parent=31 // pred_region
          %s211 = smul.u32 8, %s15
          %p212 = scmp.lt.s32.totalorder %s211, 15
          %s213 = scalar_select %p212, %s211, 15
          %s214 = smul.addr %s213, 8
          %s215 = scalar_lea.vmem %s0, %s214
          %s216 = smul.u32 8, %s15
        $region36: #{tpu_custom_call.1} parent=31 // pred_fallthru
          _
        // Predicated region
        $region37: #{tpu_custom_call.1} parent=31 // pred_check
          %p217 = pneg %p61
        $region38: #{tpu_custom_call.1} parent=31 // pred_check_branch
          %219 = sbr.rel (%p217) target = $region40
        $region39: #{tpu_custom_call.1} parent=31 // pred_region
          %s220 = smul.u32 8, %s15
          %p221 = scmp.lt.s32.totalorder %s220, 15
          %s222 = scalar_select %p221, %s220, 15
          %s223 = smul.addr %s222, 8
          %s224 = scalar_lea.vmem %s1, %s223
          %s225 = smul.u32 8, %s15
        $region40: #{tpu_custom_call.1} parent=31 // pred_fallthru
          _
      $region32: #{tpu_custom_call.1} parent=5 // pred_fallthru
        _
      %p226 = scmp.le.s32.totalorder 1, %s15
      %p227 = scmp.lt.s32.totalorder %s15, 3
      %p228 = pnand %p226, %p227
      %p229 = pneg %p228
      // Predicated region
      $region41: #{tpu_custom_call.1} parent=5 // pred_check
        _
      $region42: #{tpu_custom_call.1} parent=5 // pred_check_branch
        %231 = sbr.rel (%p228) target = $region44
      $region43: #{tpu_custom_call.1} parent=5 // pred_region
        %s232 = ssub.s32 %s15, 1
        %s233 = smul.u32 8, %s20
        %p234 = scmp.lt.s32.totalorder %s233, 15
        %s235 = scalar_select %p234, %s233, 15
        %s236 = smul.addr %s235, 8
        %s237 = scalar_lea.vmem %s0, %s236
        %p238 = pneg %p41
        %p239 = pneg %p38
        %s240 = smul.u32 8, %s20
        %p241 = scmp.lt.s32.totalorder %s240, 15
        %s242 = scalar_select %p241, %s240, 15
        %s243 = smul.addr %s242, 8
        %s244 = scalar_lea.vmem %s1, %s243
        %p245 = pneg %p67
        %p246 = pneg %p64
        %p247 = pneg %p88
        %p248 = pneg %p85
        %p249 = pneg %p109
        %p250 = pneg %p106
        %p251 = pneg %p130
        %p252 = pneg %p127
        %p253 = pneg %p151
        %p254 = pneg %p148
        %p255 = pneg %p177
        %p256 = pneg %p174
        %s257 = sand.u32 %s164, 1
        %s258 = scalar_lea.sflag [#allocation3], %s257
        %s259 = sand.u32 %s164, 1
        %s260 = smul.addr %s259, 8
        %s261 = scalar_lea.vmem [#allocation2], %s260
        %s262 = smul.u32 8, %s20
        %p263 = scmp.lt.s32.totalorder %s262, 15
        %s264 = scalar_select %p263, %s262, 15
        %s265 = smul.addr %s264, 8
        %s266 = scalar_lea.vmem %s0, %s265
        %s267 = smul.u32 8, %s20
        %s268 = smul.u32 8, %s20
        %p269 = scmp.lt.s32.totalorder %s268, 15
        %s270 = scalar_select %p269, %s268, 15
        %s271 = smul.addr %s270, 8
        %s272 = scalar_lea.vmem %s1, %s271
        %s273 = smul.u32 8, %s20
        %v275 = vld [vmem:[%s266] sm:$0xff]
        %v276 = vld [vmem:[%s266 + $0x8] sm:$0xff]
        %v277 = vld [vmem:[%s266 + $0x10] sm:$0xff]
        %v278 = vld [vmem:[%s266 + $0x18] sm:$0xff]
        %v279 = vld [vmem:[%s266 + $0x20] sm:$0xff]
        %v280 = vld [vmem:[%s266 + $0x28] sm:$0xff]
        %v281 = vld [vmem:[%s266 + $0x30] sm:$0xff]
        %v282 = vld [vmem:[%s266 + $0x38] sm:$0xff]
        %v283 = vld [vmem:[%s272] sm:$0xff]
        %v284 = vld [vmem:[%s272 + $0x8] sm:$0xff]
        %v285 = vld [vmem:[%s272 + $0x10] sm:$0xff]
        %v286 = vld [vmem:[%s272 + $0x18] sm:$0xff]
        %v287 = vld [vmem:[%s272 + $0x20] sm:$0xff]
        %v288 = vld [vmem:[%s272 + $0x28] sm:$0xff]
        %v289 = vld [vmem:[%s272 + $0x30] sm:$0xff]
        %v290 = vld [vmem:[%s272 + $0x38] sm:$0xff]
        %v291 = vld [vmem:[%s2] sm:$0xf]
        %v292 = vld [vmem:[%s2 + $0x4] sm:$0xf]
        %v293 = vld [vmem:[%s3] sm:$0xf]
        %v294 = vld [vmem:[%s3 + $0x4] sm:$0xf]
        %v295 = vld [vmem:[%s4] sm:$0xf]
        %v296 = vld [vmem:[%s4 + $0x4] sm:$0xf]
        %v297 = vld [vmem:[%s4 + $0x8] sm:$0xf]
        %v298 = vld [vmem:[%s4 + $0xc] sm:$0xf]
        %v299 = vld [vmem:[%s4 + $0x10] sm:$0xf]
        %v300 = vld [vmem:[%s4 + $0x14] sm:$0xf]
        %v301 = vld [vmem:[%s4 + $0x18] sm:$0xf]
        %v302 = vld [vmem:[%s4 + $0x1c] sm:$0xf]
        %v303 = vld [vmem:[%s5] sm:$0xf]
        %v304 = vld [vmem:[%s5 + $0x4] sm:$0xf]
        %v305 = vld [vmem:[%s5 + $0x8] sm:$0xf]
        %v306 = vld [vmem:[%s5 + $0xc] sm:$0xf]
        %v307 = vld [vmem:[%s5 + $0x10] sm:$0xf]
        %v308 = vld [vmem:[%s5 + $0x14] sm:$0xf]
        %v309 = vld [vmem:[%s5 + $0x18] sm:$0xf]
        %v310 = vld [vmem:[%s5 + $0x1c] sm:$0xf]
        %v311 = vsub.f32 %v275, %v283
        %v312 = vsub.f32 %v276, %v284
        %v313 = vsub.f32 %v277, %v285
        %v314 = vsub.f32 %v278, %v286
        %v315 = vsub.f32 %v279, %v287
        %v316 = vsub.f32 %v280, %v288
        %v317 = vsub.f32 %v281, %v289
        %v318 = vsub.f32 %v282, %v290
        %v319 = vmul.f32 %v311, %v311
        %v320 = vmul.f32 %v312, %v312
        %v321 = vmul.f32 %v313, %v313
        %v322 = vmul.f32 %v314, %v314
        %v323 = vmul.f32 %v315, %v315
        %v324 = vmul.f32 %v316, %v316
        %v325 = vmul.f32 %v317, %v317
        %v326 = vmul.f32 %v318, %v318
        %vm327 = vcmask 130048
        %v328 = vsel %vm327, %v319, 0.0
        %v329 = vsel %vm327, %v320, 0.0
        %v330 = vadd.f32 %v328, %v329
        %v331 = vsel %vm327, %v321, 0.0
        %v332 = vadd.f32 %v330, %v331
        %v333 = vsel %vm327, %v322, 0.0
        %v334 = vadd.f32 %v332, %v333
        %v335 = vsel %vm327, %v323, 0.0
        %v336 = vadd.f32 %v334, %v335
        %v337 = vsel %vm327, %v324, 0.0
        %v338 = vadd.f32 %v336, %v337
        %v339 = vsel %vm327, %v325, 0.0
        %v340 = vadd.f32 %v338, %v339
        %v341 = vsel %vm327, %v326, 0.0
        %v342 = vadd.f32 %v340, %v341
        %343 = vadd.xlane.f32.xlu0 %v342
        %v344 = vpop.xlane.xlu0 %343
        %v345 = vrot.slane %v344, 4
        %v346 = vadd.f32 %v344, %v345
        %v347 = vrot.slane %v346, 2
        %v348 = vadd.f32 %v346, %v347
        %v349 = vrot.slane %v348, 1
        %v350 = vadd.f32 %v348, %v349
        %s351 = vtos %v350
        %v352 = vpack.c.bf16 %v276, %v275
        %v353 = vpack.c.bf16 %v278, %v277
        %v354 = vpack.c.bf16 %v280, %v279
        %v355 = vpack.c.bf16 %v282, %v281
        %v358 = vunpack.c.l.b16 %v293
        %v359 = vunpack.c.l.b16 %v294
        %v360 = vpack.c.b16 %v359, %v358
        %v363 = vsel %vm327, %v352, 0
        %v366 = vsel %vm327, %v353, 0
        %v369 = vsel %vm327, %v354, 0
        %v372 = vsel %vm327, %v355, 0
        %374 = vmatprep.subr.bf16.mxu0 0
        %375 = vmatpush1.bf16.msra.mxu0 0
        %376 = vmatprep.subr.bf16.mxu0 0
        %377 = vmatpush1.bf16.msra.mxu0 0
        %378 = vmatprep.subr.bf16.mxu0 0
        %379 = vmatpush1.bf16.msra.mxu0 0
        %380 = vmatprep.subr.bf16.mxu0 0
        %381 = vmatpush1.bf16.msra.mxu0 0
        %382 = vmatprep.subr.bf16.mxu0 0
        %383 = vmatpush1.bf16.msra.mxu0 0
        %384 = vmatprep.subr.bf16.mxu0 0
        %385 = vmatpush1.bf16.msra.mxu0 0
        %386 = vmatprep.subr.bf16.mxu0 0
        %387 = vmatpush1.bf16.msra.mxu0 0
        %388 = vmatprep.subr.bf16.mxu0 0
        %389 = vmatpush1.bf16.msra.mxu0 %v360
        %390 = vmatprep.subr.bf16.mxu0 0
        %391 = vmatpush2.bf16.msra.mxu0 0
        %392 = vmatprep.subr.bf16.mxu0 0
        %393 = vmatpush2.bf16.msra.mxu0 0
        %394 = vmatprep.subr.bf16.mxu0 0
        %395 = vmatpush2.bf16.msra.mxu0 0
        %396 = vmatprep.subr.bf16.mxu0 0
        %397 = vmatpush2.bf16.msra.mxu0 0
        %398 = vmatprep.subr.bf16.mxu0 0
        %399 = vmatpush2.bf16.msra.mxu0 0
        %400 = vmatprep.subr.bf16.mxu0 0
        %401 = vmatpush2.bf16.msra.mxu0 0
        %402 = vmatprep.subr.bf16.mxu0 0
        %403 = vmatpush2.bf16.msra.mxu0 0
        %404 = vmatprep.subr.bf16.mxu0 0
        %405 = vmatpush2.bf16.msra.mxu0 0
        %406 = vmatprep.mubr.bf16.mxu0 0
        %407 = vmatmul.mubr.bf16.gmra.mxu0 %v363
        %v408 = vpop.f32.mrf.mxu0
        %v409 = vadd.f32 0.0, %v408
        %v410 = vpop.f32.mrf.mxu0
        %v411 = vpop.f32.mrf.mxu0
        %v412 = vadd.f32 0.0, %v411
        %v413 = vpop.f32.mrf.mxu0
        %414 = vmatprep.mubr.bf16.mxu0 0
        %415 = vmatmul.mubr.bf16.gmra.mxu0 %v366
        %v416 = vpop.f32.mrf.mxu0
        %v417 = vadd.f32 0.0, %v416
        %v418 = vpop.f32.mrf.mxu0
        %v419 = vpop.f32.mrf.mxu0
        %v420 = vadd.f32 0.0, %v419
        %v421 = vpop.f32.mrf.mxu0
        %422 = vmatprep.mubr.bf16.mxu0 0
        %423 = vmatmul.mubr.bf16.gmra.mxu0 %v369
        %v424 = vpop.f32.mrf.mxu0
        %v425 = vadd.f32 0.0, %v424
        %v426 = vpop.f32.mrf.mxu0
        %v427 = vpop.f32.mrf.mxu0
        %v428 = vadd.f32 0.0, %v427
        %v429 = vpop.f32.mrf.mxu0
        %430 = vmatprep.mubr.bf16.mxu0 0
        %431 = vmatmul.mubr.bf16.gmra.mxu0 %v372
        %v432 = vpop.f32.mrf.mxu0
        %v433 = vadd.f32 0.0, %v432
        %v434 = vpop.f32.mrf.mxu0
        %v435 = vpop.f32.mrf.mxu0
        %v436 = vadd.f32 0.0, %v435
        %v437 = vpop.f32.mrf.mxu0
        %438 = vdwg.mxu0
        %v441 = vunpack.c.l.b16 %v291
        %v442 = vunpack.c.l.b16 %v292
        %v443 = vpack.c.b16 %v442, %v441
        %445 = vmatprep.subr.bf16.mxu0 0
        %446 = vmatpush1.bf16.msra.mxu0 0
        %447 = vmatprep.subr.bf16.mxu0 0
        %448 = vmatpush1.bf16.msra.mxu0 0
        %449 = vmatprep.subr.bf16.mxu0 0
        %450 = vmatpush1.bf16.msra.mxu0 0
        %451 = vmatprep.subr.bf16.mxu0 0
        %452 = vmatpush1.bf16.msra.mxu0 0
        %453 = vmatprep.subr.bf16.mxu0 0
        %454 = vmatpush1.bf16.msra.mxu0 0
        %455 = vmatprep.subr.bf16.mxu0 0
        %456 = vmatpush1.bf16.msra.mxu0 0
        %457 = vmatprep.subr.bf16.mxu0 0
        %458 = vmatpush1.bf16.msra.mxu0 0
        %459 = vmatprep.subr.bf16.mxu0 0
        %460 = vmatpush1.bf16.msra.mxu0 %v443
        %461 = vmatprep.subr.bf16.mxu0 0
        %462 = vmatpush2.bf16.msra.mxu0 0
        %463 = vmatprep.subr.bf16.mxu0 0
        %464 = vmatpush2.bf16.msra.mxu0 0
        %465 = vmatprep.subr.bf16.mxu0 0
        %466 = vmatpush2.bf16.msra.mxu0 0
        %467 = vmatprep.subr.bf16.mxu0 0
        %468 = vmatpush2.bf16.msra.mxu0 0
        %469 = vmatprep.subr.bf16.mxu0 0
        %470 = vmatpush2.bf16.msra.mxu0 0
        %471 = vmatprep.subr.bf16.mxu0 0
        %472 = vmatpush2.bf16.msra.mxu0 0
        %473 = vmatprep.subr.bf16.mxu0 0
        %474 = vmatpush2.bf16.msra.mxu0 0
        %475 = vmatprep.subr.bf16.mxu0 0
        %476 = vmatpush2.bf16.msra.mxu0 0
        %477 = vmatprep.mubr.bf16.mxu0 0
        %478 = vmatmul.mubr.bf16.gmra.mxu0 %v363
        %v479 = vpop.f32.mrf.mxu0
        %v480 = vadd.f32 %v409, %v479
        %v481 = vpop.f32.mrf.mxu0
        %v482 = vpop.f32.mrf.mxu0
        %v483 = vadd.f32 %v412, %v482
        %v484 = vpop.f32.mrf.mxu0
        %485 = vmatprep.mubr.bf16.mxu0 0
        %486 = vmatmul.mubr.bf16.gmra.mxu0 %v366
        %v487 = vpop.f32.mrf.mxu0
        %v488 = vadd.f32 %v417, %v487
        %v489 = vpop.f32.mrf.mxu0
        %v490 = vpop.f32.mrf.mxu0
        %v491 = vadd.f32 %v420, %v490
        %v492 = vpop.f32.mrf.mxu0
        %493 = vmatprep.mubr.bf16.mxu0 0
        %494 = vmatmul.mubr.bf16.gmra.mxu0 %v369
        %v495 = vpop.f32.mrf.mxu0
        %v496 = vadd.f32 %v425, %v495
        %v497 = vpop.f32.mrf.mxu0
        %v498 = vpop.f32.mrf.mxu0
        %v499 = vadd.f32 %v428, %v498
        %v500 = vpop.f32.mrf.mxu0
        %501 = vmatprep.mubr.bf16.mxu0 0
        %502 = vmatmul.mubr.bf16.gmra.mxu0 %v372
        %v503 = vpop.f32.mrf.mxu0
        %v504 = vadd.f32 %v433, %v503
        %v505 = vpop.f32.mrf.mxu0
        %v506 = vpop.f32.mrf.mxu0
        %v507 = vadd.f32 %v436, %v506
        %v508 = vpop.f32.mrf.mxu0
        %509 = vdwg.mxu0
        %v510 = vpack.c.bf16 %v483, %v480
        %v511 = vpack.c.bf16 %v491, %v488
        %v512 = vpack.c.bf16 %v499, %v496
        %v513 = vpack.c.bf16 %v507, %v504
        %v522 = vunpack.c.l.b16 %v303
        %v523 = vunpack.c.l.b16 %v304
        %v524 = vunpack.c.l.b16 %v305
        %v525 = vunpack.c.l.b16 %v306
        %v526 = vunpack.c.l.b16 %v307
        %v527 = vunpack.c.l.b16 %v308
        %v528 = vunpack.c.l.b16 %v309
        %v529 = vunpack.c.l.b16 %v310
        %v530 = vpack.c.b16 %v523, %v522
        %v531 = vpack.c.b16 %v525, %v524
        %v532 = vpack.c.b16 %v527, %v526
        %v533 = vpack.c.b16 %v529, %v528
        %vm534 = vcmask 523264
        %v536 = vsel %vm534, %v530, 0
        %v539 = vsel %vm534, %v531, 0
        %v542 = vsel %vm534, %v532, 0
        %v545 = vsel %vm534, %v533, 0
        %547 = vmatprep.subr.bf16.mxu0 0
        %548 = vmatpush1.bf16.msra.mxu0 0
        %549 = vmatprep.subr.bf16.mxu0 0
        %550 = vmatpush1.bf16.msra.mxu0 0
        %551 = vmatprep.subr.bf16.mxu0 0
        %552 = vmatpush1.bf16.msra.mxu0 0
        %553 = vmatprep.subr.bf16.mxu0 0
        %554 = vmatpush1.bf16.msra.mxu0 0
        %555 = vmatprep.subr.bf16.mxu0 0
        %556 = vmatpush1.bf16.msra.mxu0 %v513
        %557 = vmatprep.subr.bf16.mxu0 0
        %558 = vmatpush1.bf16.msra.mxu0 %v512
        %559 = vmatprep.subr.bf16.mxu0 0
        %560 = vmatpush1.bf16.msra.mxu0 %v511
        %561 = vmatprep.subr.bf16.mxu0 0
        %562 = vmatpush1.bf16.msra.mxu0 %v510
        %563 = vmatprep.subr.bf16.mxu0 0
        %564 = vmatpush2.bf16.msra.mxu0 0
        %565 = vmatprep.subr.bf16.mxu0 0
        %566 = vmatpush2.bf16.msra.mxu0 0
        %567 = vmatprep.subr.bf16.mxu0 0
        %568 = vmatpush2.bf16.msra.mxu0 0
        %569 = vmatprep.subr.bf16.mxu0 0
        %570 = vmatpush2.bf16.msra.mxu0 0
        %571 = vmatprep.subr.bf16.mxu0 0
        %572 = vmatpush2.bf16.msra.mxu0 0
        %573 = vmatprep.subr.bf16.mxu0 0
        %574 = vmatpush2.bf16.msra.mxu0 0
        %575 = vmatprep.subr.bf16.mxu0 0
        %576 = vmatpush2.bf16.msra.mxu0 0
        %577 = vmatprep.subr.bf16.mxu0 0
        %578 = vmatpush2.bf16.msra.mxu0 0
        %579 = vmatprep.mubr.bf16.mxu0 0
        %580 = vmatmul.mubr.bf16.gmra.mxu0 %v536
        %v581 = vpop.f32.mrf.mxu0
        %v582 = vadd.f32 0.0, %v581
        %v583 = vpop.f32.mrf.mxu0
        %v584 = vpop.f32.mrf.mxu0
        %v585 = vadd.f32 0.0, %v584
        %v586 = vpop.f32.mrf.mxu0
        %587 = vmatprep.mubr.bf16.mxu0 0
        %588 = vmatmul.mubr.bf16.gmra.mxu0 %v539
        %v589 = vpop.f32.mrf.mxu0
        %v590 = vadd.f32 0.0, %v589
        %v591 = vpop.f32.mrf.mxu0
        %v592 = vpop.f32.mrf.mxu0
        %v593 = vadd.f32 0.0, %v592
        %v594 = vpop.f32.mrf.mxu0
        %595 = vmatprep.mubr.bf16.mxu0 0
        %596 = vmatmul.mubr.bf16.gmra.mxu0 %v542
        %v597 = vpop.f32.mrf.mxu0
        %v598 = vadd.f32 0.0, %v597
        %v599 = vpop.f32.mrf.mxu0
        %v600 = vpop.f32.mrf.mxu0
        %v601 = vadd.f32 0.0, %v600
        %v602 = vpop.f32.mrf.mxu0
        %603 = vmatprep.mubr.bf16.mxu0 0
        %604 = vmatmul.mubr.bf16.gmra.mxu0 %v545
        %v605 = vpop.f32.mrf.mxu0
        %v606 = vadd.f32 0.0, %v605
        %v607 = vpop.f32.mrf.mxu0
        %v608 = vpop.f32.mrf.mxu0
        %v609 = vadd.f32 0.0, %v608
        %v610 = vpop.f32.mrf.mxu0
        %611 = vdwg.mxu0
        %v620 = vunpack.c.l.b16 %v295
        %v621 = vunpack.c.l.b16 %v296
        %v622 = vunpack.c.l.b16 %v297
        %v623 = vunpack.c.l.b16 %v298
        %v624 = vunpack.c.l.b16 %v299
        %v625 = vunpack.c.l.b16 %v300
        %v626 = vunpack.c.l.b16 %v301
        %v627 = vunpack.c.l.b16 %v302
        %v628 = vpack.c.b16 %v621, %v620
        %v629 = vpack.c.b16 %v623, %v622
        %v630 = vpack.c.b16 %v625, %v624
        %v631 = vpack.c.b16 %v627, %v626
        %v633 = vsel %vm534, %v628, 0
        %v636 = vsel %vm534, %v629, 0
        %v639 = vsel %vm534, %v630, 0
        %v642 = vsel %vm534, %v631, 0
        %644 = vmatprep.subr.bf16.mxu0 0
        %645 = vmatpush1.bf16.msra.mxu0 0
        %646 = vmatprep.subr.bf16.mxu0 0
        %647 = vmatpush1.bf16.msra.mxu0 0
        %648 = vmatprep.subr.bf16.mxu0 0
        %649 = vmatpush1.bf16.msra.mxu0 0
        %650 = vmatprep.subr.bf16.mxu0 0
        %651 = vmatpush1.bf16.msra.mxu0 0
        %652 = vmatprep.subr.bf16.mxu0 0
        %653 = vmatpush1.bf16.msra.mxu0 %v513
        %654 = vmatprep.subr.bf16.mxu0 0
        %655 = vmatpush1.bf16.msra.mxu0 %v512
        %656 = vmatprep.subr.bf16.mxu0 0
        %657 = vmatpush1.bf16.msra.mxu0 %v511
        %658 = vmatprep.subr.bf16.mxu0 0
        %659 = vmatpush1.bf16.msra.mxu0 %v510
        %660 = vmatprep.subr.bf16.mxu0 0
        %661 = vmatpush2.bf16.msra.mxu0 0
        %662 = vmatprep.subr.bf16.mxu0 0
        %663 = vmatpush2.bf16.msra.mxu0 0
        %664 = vmatprep.subr.bf16.mxu0 0
        %665 = vmatpush2.bf16.msra.mxu0 0
        %666 = vmatprep.subr.bf16.mxu0 0
        %667 = vmatpush2.bf16.msra.mxu0 0
        %668 = vmatprep.subr.bf16.mxu0 0
        %669 = vmatpush2.bf16.msra.mxu0 0
        %670 = vmatprep.subr.bf16.mxu0 0
        %671 = vmatpush2.bf16.msra.mxu0 0
        %672 = vmatprep.subr.bf16.mxu0 0
        %673 = vmatpush2.bf16.msra.mxu0 0
        %674 = vmatprep.subr.bf16.mxu0 0
        %675 = vmatpush2.bf16.msra.mxu0 0
        %676 = vmatprep.mubr.bf16.mxu0 0
        %677 = vmatmul.mubr.bf16.gmra.mxu0 %v633
        %v678 = vpop.f32.mrf.mxu0
        %v679 = vadd.f32 %v582, %v678
        %v680 = vpop.f32.mrf.mxu0
        %v681 = vpop.f32.mrf.mxu0
        %v682 = vadd.f32 %v585, %v681
        %v683 = vpop.f32.mrf.mxu0
        %684 = vmatprep.mubr.bf16.mxu0 0
        %685 = vmatmul.mubr.bf16.gmra.mxu0 %v636
        %v686 = vpop.f32.mrf.mxu0
        %v687 = vadd.f32 %v590, %v686
        %v688 = vpop.f32.mrf.mxu0
        %v689 = vpop.f32.mrf.mxu0
        %v690 = vadd.f32 %v593, %v689
        %v691 = vpop.f32.mrf.mxu0
        %692 = vmatprep.mubr.bf16.mxu0 0
        %693 = vmatmul.mubr.bf16.gmra.mxu0 %v639
        %v694 = vpop.f32.mrf.mxu0
        %v695 = vadd.f32 %v598, %v694
        %v696 = vpop.f32.mrf.mxu0
        %v697 = vpop.f32.mrf.mxu0
        %v698 = vadd.f32 %v601, %v697
        %v699 = vpop.f32.mrf.mxu0
        %700 = vmatprep.mubr.bf16.mxu0 0
        %701 = vmatmul.mubr.bf16.gmra.mxu0 %v642
        %v702 = vpop.f32.mrf.mxu0
        %v703 = vadd.f32 %v606, %v702
        %v704 = vpop.f32.mrf.mxu0
        %v705 = vpop.f32.mrf.mxu0
        %v706 = vadd.f32 %v609, %v705
        %v707 = vpop.f32.mrf.mxu0
        %708 = vdwg.mxu0
        %v709 = vpack.c.bf16 %v284, %v283
        %v710 = vpack.c.bf16 %v286, %v285
        %v711 = vpack.c.bf16 %v288, %v287
        %v712 = vpack.c.bf16 %v290, %v289
        %v714 = vsel %vm327, %v709, 0
        %v717 = vsel %vm327, %v710, 0
        %v720 = vsel %vm327, %v711, 0
        %v723 = vsel %vm327, %v712, 0
        %725 = vmatprep.subr.bf16.mxu0 0
        %726 = vmatpush1.bf16.msra.mxu0 0
        %727 = vmatprep.subr.bf16.mxu0 0
        %728 = vmatpush1.bf16.msra.mxu0 0
        %729 = vmatprep.subr.bf16.mxu0 0
        %730 = vmatpush1.bf16.msra.mxu0 0
        %731 = vmatprep.subr.bf16.mxu0 0
        %732 = vmatpush1.bf16.msra.mxu0 0
        %733 = vmatprep.subr.bf16.mxu0 0
        %734 = vmatpush1.bf16.msra.mxu0 0
        %735 = vmatprep.subr.bf16.mxu0 0
        %736 = vmatpush1.bf16.msra.mxu0 0
        %737 = vmatprep.subr.bf16.mxu0 0
        %738 = vmatpush1.bf16.msra.mxu0 0
        %739 = vmatprep.subr.bf16.mxu0 0
        %740 = vmatpush1.bf16.msra.mxu0 %v360
        %741 = vmatprep.subr.bf16.mxu0 0
        %742 = vmatpush2.bf16.msra.mxu0 0
        %743 = vmatprep.subr.bf16.mxu0 0
        %744 = vmatpush2.bf16.msra.mxu0 0
        %745 = vmatprep.subr.bf16.mxu0 0
        %746 = vmatpush2.bf16.msra.mxu0 0
        %747 = vmatprep.subr.bf16.mxu0 0
        %748 = vmatpush2.bf16.msra.mxu0 0
        %749 = vmatprep.subr.bf16.mxu0 0
        %750 = vmatpush2.bf16.msra.mxu0 0
        %751 = vmatprep.subr.bf16.mxu0 0
        %752 = vmatpush2.bf16.msra.mxu0 0
        %753 = vmatprep.subr.bf16.mxu0 0
        %754 = vmatpush2.bf16.msra.mxu0 0
        %755 = vmatprep.subr.bf16.mxu0 0
        %756 = vmatpush2.bf16.msra.mxu0 0
        %757 = vmatprep.mubr.bf16.mxu0 0
        %758 = vmatmul.mubr.bf16.gmra.mxu0 %v714
        %v759 = vpop.f32.mrf.mxu0
        %v760 = vadd.f32 0.0, %v759
        %v761 = vpop.f32.mrf.mxu0
        %v762 = vpop.f32.mrf.mxu0
        %v763 = vadd.f32 0.0, %v762
        %v764 = vpop.f32.mrf.mxu0
        %765 = vmatprep.mubr.bf16.mxu0 0
        %766 = vmatmul.mubr.bf16.gmra.mxu0 %v717
        %v767 = vpop.f32.mrf.mxu0
        %v768 = vadd.f32 0.0, %v767
        %v769 = vpop.f32.mrf.mxu0
        %v770 = vpop.f32.mrf.mxu0
        %v771 = vadd.f32 0.0, %v770
        %v772 = vpop.f32.mrf.mxu0
        %773 = vmatprep.mubr.bf16.mxu0 0
        %774 = vmatmul.mubr.bf16.gmra.mxu0 %v720
        %v775 = vpop.f32.mrf.mxu0
        %v776 = vadd.f32 0.0, %v775
        %v777 = vpop.f32.mrf.mxu0
        %v778 = vpop.f32.mrf.mxu0
        %v779 = vadd.f32 0.0, %v778
        %v780 = vpop.f32.mrf.mxu0
        %781 = vmatprep.mubr.bf16.mxu0 0
        %782 = vmatmul.mubr.bf16.gmra.mxu0 %v723
        %v783 = vpop.f32.mrf.mxu0
        %v784 = vadd.f32 0.0, %v783
        %v785 = vpop.f32.mrf.mxu0
        %v786 = vpop.f32.mrf.mxu0
        %v787 = vadd.f32 0.0, %v786
        %v788 = vpop.f32.mrf.mxu0
        %789 = vdwg.mxu0
        %790 = vmatprep.subr.bf16.mxu0 0
        %791 = vmatpush1.bf16.msra.mxu0 0
        %792 = vmatprep.subr.bf16.mxu0 0
        %793 = vmatpush1.bf16.msra.mxu0 0
        %794 = vmatprep.subr.bf16.mxu0 0
        %795 = vmatpush1.bf16.msra.mxu0 0
        %796 = vmatprep.subr.bf16.mxu0 0
        %797 = vmatpush1.bf16.msra.mxu0 0
        %798 = vmatprep.subr.bf16.mxu0 0
        %799 = vmatpush1.bf16.msra.mxu0 0
        %800 = vmatprep.subr.bf16.mxu0 0
        %801 = vmatpush1.bf16.msra.mxu0 0
        %802 = vmatprep.subr.bf16.mxu0 0
        %803 = vmatpush1.bf16.msra.mxu0 0
        %804 = vmatprep.subr.bf16.mxu0 0
        %805 = vmatpush1.bf16.msra.mxu0 %v443
        %806 = vmatprep.subr.bf16.mxu0 0
        %807 = vmatpush2.bf16.msra.mxu0 0
        %808 = vmatprep.subr.bf16.mxu0 0
        %809 = vmatpush2.bf16.msra.mxu0 0
        %810 = vmatprep.subr.bf16.mxu0 0
        %811 = vmatpush2.bf16.msra.mxu0 0
        %812 = vmatprep.subr.bf16.mxu0 0
        %813 = vmatpush2.bf16.msra.mxu0 0
        %814 = vmatprep.subr.bf16.mxu0 0
        %815 = vmatpush2.bf16.msra.mxu0 0
        %816 = vmatprep.subr.bf16.mxu0 0
        %817 = vmatpush2.bf16.msra.mxu0 0
        %818 = vmatprep.subr.bf16.mxu0 0
        %819 = vmatpush2.bf16.msra.mxu0 0
        %820 = vmatprep.subr.bf16.mxu0 0
        %821 = vmatpush2.bf16.msra.mxu0 0
        %822 = vmatprep.mubr.bf16.mxu0 0
        %823 = vmatmul.mubr.bf16.gmra.mxu0 %v714
        %v824 = vpop.f32.mrf.mxu0
        %v825 = vadd.f32 %v760, %v824
        %v826 = vpop.f32.mrf.mxu0
        %v827 = vpop.f32.mrf.mxu0
        %v828 = vadd.f32 %v763, %v827
        %v829 = vpop.f32.mrf.mxu0
        %830 = vmatprep.mubr.bf16.mxu0 0
        %831 = vmatmul.mubr.bf16.gmra.mxu0 %v717
        %v832 = vpop.f32.mrf.mxu0
        %v833 = vadd.f32 %v768, %v832
        %v834 = vpop.f32.mrf.mxu0
        %v835 = vpop.f32.mrf.mxu0
        %v836 = vadd.f32 %v771, %v835
        %v837 = vpop.f32.mrf.mxu0
        %838 = vmatprep.mubr.bf16.mxu0 0
        %839 = vmatmul.mubr.bf16.gmra.mxu0 %v720
        %v840 = vpop.f32.mrf.mxu0
        %v841 = vadd.f32 %v776, %v840
        %v842 = vpop.f32.mrf.mxu0
        %v843 = vpop.f32.mrf.mxu0
        %v844 = vadd.f32 %v779, %v843
        %v845 = vpop.f32.mrf.mxu0
        %846 = vmatprep.mubr.bf16.mxu0 0
        %847 = vmatmul.mubr.bf16.gmra.mxu0 %v723
        %v848 = vpop.f32.mrf.mxu0
        %v849 = vadd.f32 %v784, %v848
        %v850 = vpop.f32.mrf.mxu0
        %v851 = vpop.f32.mrf.mxu0
        %v852 = vadd.f32 %v787, %v851
        %v853 = vpop.f32.mrf.mxu0
        %854 = vdwg.mxu0
        %v855 = vpack.c.bf16 %v828, %v825
        %v856 = vpack.c.bf16 %v836, %v833
        %v857 = vpack.c.bf16 %v844, %v841
        %v858 = vpack.c.bf16 %v852, %v849
        %859 = vmatprep.subr.bf16.mxu0 0
        %860 = vmatpush1.bf16.msra.mxu0 0
        %861 = vmatprep.subr.bf16.mxu0 0
        %862 = vmatpush1.bf16.msra.mxu0 0
        %863 = vmatprep.subr.bf16.mxu0 0
        %864 = vmatpush1.bf16.msra.mxu0 0
        %865 = vmatprep.subr.bf16.mxu0 0
        %866 = vmatpush1.bf16.msra.mxu0 0
        %867 = vmatprep.subr.bf16.mxu0 0
        %868 = vmatpush1.bf16.msra.mxu0 %v858
        %869 = vmatprep.subr.bf16.mxu0 0
        %870 = vmatpush1.bf16.msra.mxu0 %v857
        %871 = vmatprep.subr.bf16.mxu0 0
        %872 = vmatpush1.bf16.msra.mxu0 %v856
        %873 = vmatprep.subr.bf16.mxu0 0
        %874 = vmatpush1.bf16.msra.mxu0 %v855
        %875 = vmatprep.subr.bf16.mxu0 0
        %876 = vmatpush2.bf16.msra.mxu0 0
        %877 = vmatprep.subr.bf16.mxu0 0
        %878 = vmatpush2.bf16.msra.mxu0 0
        %879 = vmatprep.subr.bf16.mxu0 0
        %880 = vmatpush2.bf16.msra.mxu0 0
        %881 = vmatprep.subr.bf16.mxu0 0
        %882 = vmatpush2.bf16.msra.mxu0 0
        %883 = vmatprep.subr.bf16.mxu0 0
        %884 = vmatpush2.bf16.msra.mxu0 0
        %885 = vmatprep.subr.bf16.mxu0 0
        %886 = vmatpush2.bf16.msra.mxu0 0
        %887 = vmatprep.subr.bf16.mxu0 0
        %888 = vmatpush2.bf16.msra.mxu0 0
        %889 = vmatprep.subr.bf16.mxu0 0
        %890 = vmatpush2.bf16.msra.mxu0 0
        %891 = vmatprep.mubr.bf16.mxu0 0
        %892 = vmatmul.mubr.bf16.gmra.mxu0 %v536
        %v893 = vpop.f32.mrf.mxu0
        %v894 = vadd.f32 0.0, %v893
        %v895 = vpop.f32.mrf.mxu0
        %v896 = vpop.f32.mrf.mxu0
        %v897 = vadd.f32 0.0, %v896
        %v898 = vpop.f32.mrf.mxu0
        %899 = vmatprep.mubr.bf16.mxu0 0
        %900 = vmatmul.mubr.bf16.gmra.mxu0 %v539
        %v901 = vpop.f32.mrf.mxu0
        %v902 = vadd.f32 0.0, %v901
        %v903 = vpop.f32.mrf.mxu0
        %v904 = vpop.f32.mrf.mxu0
        %v905 = vadd.f32 0.0, %v904
        %v906 = vpop.f32.mrf.mxu0
        %907 = vmatprep.mubr.bf16.mxu0 0
        %908 = vmatmul.mubr.bf16.gmra.mxu0 %v542
        %v909 = vpop.f32.mrf.mxu0
        %v910 = vadd.f32 0.0, %v909
        %v911 = vpop.f32.mrf.mxu0
        %v912 = vpop.f32.mrf.mxu0
        %v913 = vadd.f32 0.0, %v912
        %v914 = vpop.f32.mrf.mxu0
        %915 = vmatprep.mubr.bf16.mxu0 0
        %916 = vmatmul.mubr.bf16.gmra.mxu0 %v545
        %v917 = vpop.f32.mrf.mxu0
        %v918 = vadd.f32 0.0, %v917
        %v919 = vpop.f32.mrf.mxu0
        %v920 = vpop.f32.mrf.mxu0
        %v921 = vadd.f32 0.0, %v920
        %v922 = vpop.f32.mrf.mxu0
        %923 = vdwg.mxu0
        %924 = vmatprep.subr.bf16.mxu0 0
        %925 = vmatpush1.bf16.msra.mxu0 0
        %926 = vmatprep.subr.bf16.mxu0 0
        %927 = vmatpush1.bf16.msra.mxu0 0
        %928 = vmatprep.subr.bf16.mxu0 0
        %929 = vmatpush1.bf16.msra.mxu0 0
        %930 = vmatprep.subr.bf16.mxu0 0
        %931 = vmatpush1.bf16.msra.mxu0 0
        %932 = vmatprep.subr.bf16.mxu0 0
        %933 = vmatpush1.bf16.msra.mxu0 %v858
        %934 = vmatprep.subr.bf16.mxu0 0
        %935 = vmatpush1.bf16.msra.mxu0 %v857
        %936 = vmatprep.subr.bf16.mxu0 0
        %937 = vmatpush1.bf16.msra.mxu0 %v856
        %938 = vmatprep.subr.bf16.mxu0 0
        %939 = vmatpush1.bf16.msra.mxu0 %v855
        %940 = vmatprep.subr.bf16.mxu0 0
        %941 = vmatpush2.bf16.msra.mxu0 0
        %942 = vmatprep.subr.bf16.mxu0 0
        %943 = vmatpush2.bf16.msra.mxu0 0
        %944 = vmatprep.subr.bf16.mxu0 0
        %945 = vmatpush2.bf16.msra.mxu0 0
        %946 = vmatprep.subr.bf16.mxu0 0
        %947 = vmatpush2.bf16.msra.mxu0 0
        %948 = vmatprep.subr.bf16.mxu0 0
        %949 = vmatpush2.bf16.msra.mxu0 0
        %950 = vmatprep.subr.bf16.mxu0 0
        %951 = vmatpush2.bf16.msra.mxu0 0
        %952 = vmatprep.subr.bf16.mxu0 0
        %953 = vmatpush2.bf16.msra.mxu0 0
        %954 = vmatprep.subr.bf16.mxu0 0
        %955 = vmatpush2.bf16.msra.mxu0 0
        %956 = vmatprep.mubr.bf16.mxu0 0
        %957 = vmatmul.mubr.bf16.gmra.mxu0 %v633
        %v958 = vpop.f32.mrf.mxu0
        %v959 = vadd.f32 %v894, %v958
        %v960 = vpop.f32.mrf.mxu0
        %v961 = vpop.f32.mrf.mxu0
        %v962 = vadd.f32 %v897, %v961
        %v963 = vpop.f32.mrf.mxu0
        %964 = vmatprep.mubr.bf16.mxu0 0
        %965 = vmatmul.mubr.bf16.gmra.mxu0 %v636
        %v966 = vpop.f32.mrf.mxu0
        %v967 = vadd.f32 %v902, %v966
        %v968 = vpop.f32.mrf.mxu0
        %v969 = vpop.f32.mrf.mxu0
        %v970 = vadd.f32 %v905, %v969
        %v971 = vpop.f32.mrf.mxu0
        %972 = vmatprep.mubr.bf16.mxu0 0
        %973 = vmatmul.mubr.bf16.gmra.mxu0 %v639
        %v974 = vpop.f32.mrf.mxu0
        %v975 = vadd.f32 %v910, %v974
        %v976 = vpop.f32.mrf.mxu0
        %v977 = vpop.f32.mrf.mxu0
        %v978 = vadd.f32 %v913, %v977
        %v979 = vpop.f32.mrf.mxu0
        %980 = vmatprep.mubr.bf16.mxu0 0
        %981 = vmatmul.mubr.bf16.gmra.mxu0 %v642
        %v982 = vpop.f32.mrf.mxu0
        %v983 = vadd.f32 %v918, %v982
        %v984 = vpop.f32.mrf.mxu0
        %v985 = vpop.f32.mrf.mxu0
        %v986 = vadd.f32 %v921, %v985
        %v987 = vpop.f32.mrf.mxu0
        %988 = vdwg.mxu0
        %v989 = vmul.f32 %v679, %v959
        %v990 = vmul.f32 %v682, %v962
        %v991 = vmul.f32 %v687, %v967
        %v992 = vmul.f32 %v690, %v970
        %v993 = vmul.f32 %v695, %v975
        %v994 = vmul.f32 %v698, %v978
        %v995 = vmul.f32 %v703, %v983
        %v996 = vmul.f32 %v706, %v986
        %v997 = vmul.f32 %v679, %v679
        %v998 = vmul.f32 %v682, %v682
        %v999 = vmul.f32 %v687, %v687
        %v1000 = vmul.f32 %v690, %v690
        %v1001 = vmul.f32 %v695, %v695
        %v1002 = vmul.f32 %v698, %v698
        %v1003 = vmul.f32 %v703, %v703
        %v1004 = vmul.f32 %v706, %v706
        %v1005 = vmul.f32 %v959, %v959
        %v1006 = vmul.f32 %v962, %v962
        %v1007 = vmul.f32 %v967, %v967
        %v1008 = vmul.f32 %v970, %v970
        %v1009 = vmul.f32 %v975, %v975
        %v1010 = vmul.f32 %v978, %v978
        %v1011 = vmul.f32 %v983, %v983
        %v1012 = vmul.f32 %v986, %v986
        %v1013 = vadd.f32 %v997, %v1005
        %v1014 = vadd.f32 %v998, %v1006
        %v1015 = vadd.f32 %v999, %v1007
        %v1016 = vadd.f32 %v1000, %v1008
        %v1017 = vadd.f32 %v1001, %v1009
        %v1018 = vadd.f32 %v1002, %v1010
        %v1019 = vadd.f32 %v1003, %v1011
        %v1020 = vadd.f32 %v1004, %v1012
        %v1021 = vmul.f32 %v275, %v283
        %v1022 = vmul.f32 %v276, %v284
        %v1023 = vmul.f32 %v277, %v285
        %v1024 = vmul.f32 %v278, %v286
        %v1025 = vmul.f32 %v279, %v287
        %v1026 = vmul.f32 %v280, %v288
        %v1027 = vmul.f32 %v281, %v289
        %v1028 = vmul.f32 %v282, %v290
        %v1029 = vpack.c.bf16 %v1022, %v1021
        %v1030 = vpack.c.bf16 %v1024, %v1023
        %v1031 = vpack.c.bf16 %v1026, %v1025
        %v1032 = vpack.c.bf16 %v1028, %v1027
        %v1034 = vsel %vm327, %v1029, 0
        %v1037 = vsel %vm327, %v1030, 0
        %v1040 = vsel %vm327, %v1031, 0
        %v1043 = vsel %vm327, %v1032, 0
        %1045 = vmatprep.subr.bf16.mxu0 0
        %1046 = vmatpush1.bf16.msra.mxu0 0
        %1047 = vmatprep.subr.bf16.mxu0 0
        %1048 = vmatpush1.bf16.msra.mxu0 0
        %1049 = vmatprep.subr.bf16.mxu0 0
        %1050 = vmatpush1.bf16.msra.mxu0 0
        %1051 = vmatprep.subr.bf16.mxu0 0
        %1052 = vmatpush1.bf16.msra.mxu0 0
        %1053 = vmatprep.subr.bf16.mxu0 0
        %1054 = vmatpush1.bf16.msra.mxu0 0
        %1055 = vmatprep.subr.bf16.mxu0 0
        %1056 = vmatpush1.bf16.msra.mxu0 0
        %1057 = vmatprep.subr.bf16.mxu0 0
        %1058 = vmatpush1.bf16.msra.mxu0 0
        %1059 = vmatprep.subr.bf16.mxu0 0
        %1060 = vmatpush1.bf16.msra.mxu0 %v360
        %1061 = vmatprep.subr.bf16.mxu0 0
        %1062 = vmatpush2.bf16.msra.mxu0 0
        %1063 = vmatprep.subr.bf16.mxu0 0
        %1064 = vmatpush2.bf16.msra.mxu0 0
        %1065 = vmatprep.subr.bf16.mxu0 0
        %1066 = vmatpush2.bf16.msra.mxu0 0
        %1067 = vmatprep.subr.bf16.mxu0 0
        %1068 = vmatpush2.bf16.msra.mxu0 0
        %1069 = vmatprep.subr.bf16.mxu0 0
        %1070 = vmatpush2.bf16.msra.mxu0 0
        %1071 = vmatprep.subr.bf16.mxu0 0
        %1072 = vmatpush2.bf16.msra.mxu0 0
        %1073 = vmatprep.subr.bf16.mxu0 0
        %1074 = vmatpush2.bf16.msra.mxu0 0
        %1075 = vmatprep.subr.bf16.mxu0 0
        %1076 = vmatpush2.bf16.msra.mxu0 0
        %1077 = vmatprep.mubr.bf16.mxu0 0
        %1078 = vmatmul.mubr.bf16.gmra.mxu0 %v1034
        %v1079 = vpop.f32.mrf.mxu0
        %v1080 = vadd.f32 0.0, %v1079
        %v1081 = vpop.f32.mrf.mxu0
        %v1082 = vpop.f32.mrf.mxu0
        %v1083 = vadd.f32 0.0, %v1082
        %v1084 = vpop.f32.mrf.mxu0
        %1085 = vmatprep.mubr.bf16.mxu0 0
        %1086 = vmatmul.mubr.bf16.gmra.mxu0 %v1037
        %v1087 = vpop.f32.mrf.mxu0
        %v1088 = vadd.f32 0.0, %v1087
        %v1089 = vpop.f32.mrf.mxu0
        %v1090 = vpop.f32.mrf.mxu0
        %v1091 = vadd.f32 0.0, %v1090
        %v1092 = vpop.f32.mrf.mxu0
        %1093 = vmatprep.mubr.bf16.mxu0 0
        %1094 = vmatmul.mubr.bf16.gmra.mxu0 %v1040
        %v1095 = vpop.f32.mrf.mxu0
        %v1096 = vadd.f32 0.0, %v1095
        %v1097 = vpop.f32.mrf.mxu0
        %v1098 = vpop.f32.mrf.mxu0
        %v1099 = vadd.f32 0.0, %v1098
        %v1100 = vpop.f32.mrf.mxu0
        %1101 = vmatprep.mubr.bf16.mxu0 0
        %1102 = vmatmul.mubr.bf16.gmra.mxu0 %v1043
        %v1103 = vpop.f32.mrf.mxu0
        %v1104 = vadd.f32 0.0, %v1103
        %v1105 = vpop.f32.mrf.mxu0
        %v1106 = vpop.f32.mrf.mxu0
        %v1107 = vadd.f32 0.0, %v1106
        %v1108 = vpop.f32.mrf.mxu0
        %1109 = vdwg.mxu0
        %1110 = vmatprep.subr.bf16.mxu0 0
        %1111 = vmatpush1.bf16.msra.mxu0 0
        %1112 = vmatprep.subr.bf16.mxu0 0
        %1113 = vmatpush1.bf16.msra.mxu0 0
        %1114 = vmatprep.subr.bf16.mxu0 0
        %1115 = vmatpush1.bf16.msra.mxu0 0
        %1116 = vmatprep.subr.bf16.mxu0 0
        %1117 = vmatpush1.bf16.msra.mxu0 0
        %1118 = vmatprep.subr.bf16.mxu0 0
        %1119 = vmatpush1.bf16.msra.mxu0 0
        %1120 = vmatprep.subr.bf16.mxu0 0
        %1121 = vmatpush1.bf16.msra.mxu0 0
        %1122 = vmatprep.subr.bf16.mxu0 0
        %1123 = vmatpush1.bf16.msra.mxu0 0
        %1124 = vmatprep.subr.bf16.mxu0 0
        %1125 = vmatpush1.bf16.msra.mxu0 %v443
        %1126 = vmatprep.subr.bf16.mxu0 0
        %1127 = vmatpush2.bf16.msra.mxu0 0
        %1128 = vmatprep.subr.bf16.mxu0 0
        %1129 = vmatpush2.bf16.msra.mxu0 0
        %1130 = vmatprep.subr.bf16.mxu0 0
        %1131 = vmatpush2.bf16.msra.mxu0 0
        %1132 = vmatprep.subr.bf16.mxu0 0
        %1133 = vmatpush2.bf16.msra.mxu0 0
        %1134 = vmatprep.subr.bf16.mxu0 0
        %1135 = vmatpush2.bf16.msra.mxu0 0
        %1136 = vmatprep.subr.bf16.mxu0 0
        %1137 = vmatpush2.bf16.msra.mxu0 0
        %1138 = vmatprep.subr.bf16.mxu0 0
        %1139 = vmatpush2.bf16.msra.mxu0 0
        %1140 = vmatprep.subr.bf16.mxu0 0
        %1141 = vmatpush2.bf16.msra.mxu0 0
        %1142 = vmatprep.mubr.bf16.mxu0 0
        %1143 = vmatmul.mubr.bf16.gmra.mxu0 %v1034
        %v1144 = vpop.f32.mrf.mxu0
        %v1145 = vadd.f32 %v1080, %v1144
        %v1146 = vpop.f32.mrf.mxu0
        %v1147 = vpop.f32.mrf.mxu0
        %v1148 = vadd.f32 %v1083, %v1147
        %v1149 = vpop.f32.mrf.mxu0
        %1150 = vmatprep.mubr.bf16.mxu0 0
        %1151 = vmatmul.mubr.bf16.gmra.mxu0 %v1037
        %v1152 = vpop.f32.mrf.mxu0
        %v1153 = vadd.f32 %v1088, %v1152
        %v1154 = vpop.f32.mrf.mxu0
        %v1155 = vpop.f32.mrf.mxu0
        %v1156 = vadd.f32 %v1091, %v1155
        %v1157 = vpop.f32.mrf.mxu0
        %1158 = vmatprep.mubr.bf16.mxu0 0
        %1159 = vmatmul.mubr.bf16.gmra.mxu0 %v1040
        %v1160 = vpop.f32.mrf.mxu0
        %v1161 = vadd.f32 %v1096, %v1160
        %v1162 = vpop.f32.mrf.mxu0
        %v1163 = vpop.f32.mrf.mxu0
        %v1164 = vadd.f32 %v1099, %v1163
        %v1165 = vpop.f32.mrf.mxu0
        %1166 = vmatprep.mubr.bf16.mxu0 0
        %1167 = vmatmul.mubr.bf16.gmra.mxu0 %v1043
        %v1168 = vpop.f32.mrf.mxu0
        %v1169 = vadd.f32 %v1104, %v1168
        %v1170 = vpop.f32.mrf.mxu0
        %v1171 = vpop.f32.mrf.mxu0
        %v1172 = vadd.f32 %v1107, %v1171
        %v1173 = vpop.f32.mrf.mxu0
        %1174 = vdwg.mxu0
        %v1175 = vpack.c.bf16 %v1148, %v1145
        %v1176 = vpack.c.bf16 %v1156, %v1153
        %v1177 = vpack.c.bf16 %v1164, %v1161
        %v1178 = vpack.c.bf16 %v1172, %v1169
        %1179 = vmatprep.subr.bf16.mxu0 0
        %1180 = vmatpush1.bf16.msra.mxu0 0
        %1181 = vmatprep.subr.bf16.mxu0 0
        %1182 = vmatpush1.bf16.msra.mxu0 0
        %1183 = vmatprep.subr.bf16.mxu0 0
        %1184 = vmatpush1.bf16.msra.mxu0 0
        %1185 = vmatprep.subr.bf16.mxu0 0
        %1186 = vmatpush1.bf16.msra.mxu0 0
        %1187 = vmatprep.subr.bf16.mxu0 0
        %1188 = vmatpush1.bf16.msra.mxu0 %v1178
        %1189 = vmatprep.subr.bf16.mxu0 0
        %1190 = vmatpush1.bf16.msra.mxu0 %v1177
        %1191 = vmatprep.subr.bf16.mxu0 0
        %1192 = vmatpush1.bf16.msra.mxu0 %v1176
        %1193 = vmatprep.subr.bf16.mxu0 0
        %1194 = vmatpush1.bf16.msra.mxu0 %v1175
        %1195 = vmatprep.subr.bf16.mxu0 0
        %1196 = vmatpush2.bf16.msra.mxu0 0
        %1197 = vmatprep.subr.bf16.mxu0 0
        %1198 = vmatpush2.bf16.msra.mxu0 0
        %1199 = vmatprep.subr.bf16.mxu0 0
        %1200 = vmatpush2.bf16.msra.mxu0 0
        %1201 = vmatprep.subr.bf16.mxu0 0
        %1202 = vmatpush2.bf16.msra.mxu0 0
        %1203 = vmatprep.subr.bf16.mxu0 0
        %1204 = vmatpush2.bf16.msra.mxu0 0
        %1205 = vmatprep.subr.bf16.mxu0 0
        %1206 = vmatpush2.bf16.msra.mxu0 0
        %1207 = vmatprep.subr.bf16.mxu0 0
        %1208 = vmatpush2.bf16.msra.mxu0 0
        %1209 = vmatprep.subr.bf16.mxu0 0
        %1210 = vmatpush2.bf16.msra.mxu0 0
        %1211 = vmatprep.mubr.bf16.mxu0 0
        %1212 = vmatmul.mubr.bf16.gmra.mxu0 %v536
        %v1213 = vpop.f32.mrf.mxu0
        %v1214 = vadd.f32 0.0, %v1213
        %v1215 = vpop.f32.mrf.mxu0
        %v1216 = vpop.f32.mrf.mxu0
        %v1217 = vadd.f32 0.0, %v1216
        %v1218 = vpop.f32.mrf.mxu0
        %1219 = vmatprep.mubr.bf16.mxu0 0
        %1220 = vmatmul.mubr.bf16.gmra.mxu0 %v539
        %v1221 = vpop.f32.mrf.mxu0
        %v1222 = vadd.f32 0.0, %v1221
        %v1223 = vpop.f32.mrf.mxu0
        %v1224 = vpop.f32.mrf.mxu0
        %v1225 = vadd.f32 0.0, %v1224
        %v1226 = vpop.f32.mrf.mxu0
        %1227 = vmatprep.mubr.bf16.mxu0 0
        %1228 = vmatmul.mubr.bf16.gmra.mxu0 %v542
        %v1229 = vpop.f32.mrf.mxu0
        %v1230 = vadd.f32 0.0, %v1229
        %v1231 = vpop.f32.mrf.mxu0
        %v1232 = vpop.f32.mrf.mxu0
        %v1233 = vadd.f32 0.0, %v1232
        %v1234 = vpop.f32.mrf.mxu0
        %1235 = vmatprep.mubr.bf16.mxu0 0
        %1236 = vmatmul.mubr.bf16.gmra.mxu0 %v545
        %v1237 = vpop.f32.mrf.mxu0
        %v1238 = vadd.f32 0.0, %v1237
        %v1239 = vpop.f32.mrf.mxu0
        %v1240 = vpop.f32.mrf.mxu0
        %v1241 = vadd.f32 0.0, %v1240
        %v1242 = vpop.f32.mrf.mxu0
        %1243 = vdwg.mxu0
        %1244 = vmatprep.subr.bf16.mxu0 0
        %1245 = vmatpush1.bf16.msra.mxu0 0
        %1246 = vmatprep.subr.bf16.mxu0 0
        %1247 = vmatpush1.bf16.msra.mxu0 0
        %1248 = vmatprep.subr.bf16.mxu0 0
        %1249 = vmatpush1.bf16.msra.mxu0 0
        %1250 = vmatprep.subr.bf16.mxu0 0
        %1251 = vmatpush1.bf16.msra.mxu0 0
        %1252 = vmatprep.subr.bf16.mxu0 0
        %1253 = vmatpush1.bf16.msra.mxu0 %v1178
        %1254 = vmatprep.subr.bf16.mxu0 0
        %1255 = vmatpush1.bf16.msra.mxu0 %v1177
        %1256 = vmatprep.subr.bf16.mxu0 0
        %1257 = vmatpush1.bf16.msra.mxu0 %v1176
        %1258 = vmatprep.subr.bf16.mxu0 0
        %1259 = vmatpush1.bf16.msra.mxu0 %v1175
        %1260 = vmatprep.subr.bf16.mxu0 0
        %1261 = vmatpush2.bf16.msra.mxu0 0
        %1262 = vmatprep.subr.bf16.mxu0 0
        %1263 = vmatpush2.bf16.msra.mxu0 0
        %1264 = vmatprep.subr.bf16.mxu0 0
        %1265 = vmatpush2.bf16.msra.mxu0 0
        %1266 = vmatprep.subr.bf16.mxu0 0
        %1267 = vmatpush2.bf16.msra.mxu0 0
        %1268 = vmatprep.subr.bf16.mxu0 0
        %1269 = vmatpush2.bf16.msra.mxu0 0
        %1270 = vmatprep.subr.bf16.mxu0 0
        %1271 = vmatpush2.bf16.msra.mxu0 0
        %1272 = vmatprep.subr.bf16.mxu0 0
        %1273 = vmatpush2.bf16.msra.mxu0 0
        %1274 = vmatprep.subr.bf16.mxu0 0
        %1275 = vmatpush2.bf16.msra.mxu0 0
        %1276 = vmatprep.mubr.bf16.mxu0 0
        %1277 = vmatmul.mubr.bf16.gmra.mxu0 %v633
        %v1278 = vpop.f32.mrf.mxu0
        %v1279 = vadd.f32 %v1214, %v1278
        %v1280 = vpop.f32.mrf.mxu0
        %v1281 = vpop.f32.mrf.mxu0
        %v1282 = vadd.f32 %v1217, %v1281
        %v1283 = vpop.f32.mrf.mxu0
        %1284 = vmatprep.mubr.bf16.mxu0 0
        %1285 = vmatmul.mubr.bf16.gmra.mxu0 %v636
        %v1286 = vpop.f32.mrf.mxu0
        %v1287 = vadd.f32 %v1222, %v1286
        %v1288 = vpop.f32.mrf.mxu0
        %v1289 = vpop.f32.mrf.mxu0
        %v1290 = vadd.f32 %v1225, %v1289
        %v1291 = vpop.f32.mrf.mxu0
        %1292 = vmatprep.mubr.bf16.mxu0 0
        %1293 = vmatmul.mubr.bf16.gmra.mxu0 %v639
        %v1294 = vpop.f32.mrf.mxu0
        %v1295 = vadd.f32 %v1230, %v1294
        %v1296 = vpop.f32.mrf.mxu0
        %v1297 = vpop.f32.mrf.mxu0
        %v1298 = vadd.f32 %v1233, %v1297
        %v1299 = vpop.f32.mrf.mxu0
        %1300 = vmatprep.mubr.bf16.mxu0 0
        %1301 = vmatmul.mubr.bf16.gmra.mxu0 %v642
        %v1302 = vpop.f32.mrf.mxu0
        %v1303 = vadd.f32 %v1238, %v1302
        %v1304 = vpop.f32.mrf.mxu0
        %v1305 = vpop.f32.mrf.mxu0
        %v1306 = vadd.f32 %v1241, %v1305
        %v1307 = vpop.f32.mrf.mxu0
        %1308 = vdwg.mxu0
        %v1309 = vsub.f32 %v1279, %v989
        %v1310 = vsub.f32 %v1282, %v990
        %v1311 = vsub.f32 %v1287, %v991
        %v1312 = vsub.f32 %v1290, %v992
        %v1313 = vsub.f32 %v1295, %v993
        %v1314 = vsub.f32 %v1298, %v994
        %v1315 = vsub.f32 %v1303, %v995
        %v1316 = vsub.f32 %v1306, %v996
        %v1317 = vmul.f32 %v989, 2.0
        %v1318 = vmul.f32 %v990, 2.0
        %v1319 = vmul.f32 %v991, 2.0
        %v1320 = vmul.f32 %v992, 2.0
        %v1321 = vmul.f32 %v993, 2.0
        %v1322 = vmul.f32 %v994, 2.0
        %v1323 = vmul.f32 %v995, 2.0
        %v1324 = vmul.f32 %v996, 2.0
        %v1325 = vadd.f32 %v1317, 0.0001
        %v1326 = vadd.f32 %v1318, 0.0001
        %v1327 = vadd.f32 %v1319, 0.0001
        %v1328 = vadd.f32 %v1320, 0.0001
        %v1329 = vadd.f32 %v1321, 0.0001
        %v1330 = vadd.f32 %v1322, 0.0001
        %v1331 = vadd.f32 %v1323, 0.0001
        %v1332 = vadd.f32 %v1324, 0.0001
        %v1333 = vmul.f32 %v1309, 2.0
        %v1334 = vmul.f32 %v1310, 2.0
        %v1335 = vmul.f32 %v1311, 2.0
        %v1336 = vmul.f32 %v1312, 2.0
        %v1337 = vmul.f32 %v1313, 2.0
        %v1338 = vmul.f32 %v1314, 2.0
        %v1339 = vmul.f32 %v1315, 2.0
        %v1340 = vmul.f32 %v1316, 2.0
        %v1341 = vadd.f32 %v1333, 0.0009
        %v1342 = vadd.f32 %v1334, 0.0009
        %v1343 = vadd.f32 %v1335, 0.0009
        %v1344 = vadd.f32 %v1336, 0.0009
        %v1345 = vadd.f32 %v1337, 0.0009
        %v1346 = vadd.f32 %v1338, 0.0009
        %v1347 = vadd.f32 %v1339, 0.0009
        %v1348 = vadd.f32 %v1340, 0.0009
        %v1349 = vmul.f32 %v1325, %v1341
        %v1350 = vmul.f32 %v1326, %v1342
        %v1351 = vmul.f32 %v1327, %v1343
        %v1352 = vmul.f32 %v1328, %v1344
        %v1353 = vmul.f32 %v1329, %v1345
        %v1354 = vmul.f32 %v1330, %v1346
        %v1355 = vmul.f32 %v1331, %v1347
        %v1356 = vmul.f32 %v1332, %v1348
        %v1357 = vmul.f32 %v275, %v275
        %v1358 = vmul.f32 %v276, %v276
        %v1359 = vmul.f32 %v277, %v277
        %v1360 = vmul.f32 %v278, %v278
        %v1361 = vmul.f32 %v279, %v279
        %v1362 = vmul.f32 %v280, %v280
        %v1363 = vmul.f32 %v281, %v281
        %v1364 = vmul.f32 %v282, %v282
        %v1365 = vpack.c.bf16 %v1358, %v1357
        %v1366 = vpack.c.bf16 %v1360, %v1359
        %v1367 = vpack.c.bf16 %v1362, %v1361
        %v1368 = vpack.c.bf16 %v1364, %v1363
        %v1370 = vsel %vm327, %v1365, 0
        %v1373 = vsel %vm327, %v1366, 0
        %v1376 = vsel %vm327, %v1367, 0
        %v1379 = vsel %vm327, %v1368, 0
        %1381 = vmatprep.subr.bf16.mxu0 0
        %1382 = vmatpush1.bf16.msra.mxu0 0
        %1383 = vmatprep.subr.bf16.mxu0 0
        %1384 = vmatpush1.bf16.msra.mxu0 0
        %1385 = vmatprep.subr.bf16.mxu0 0
        %1386 = vmatpush1.bf16.msra.mxu0 0
        %1387 = vmatprep.subr.bf16.mxu0 0
        %1388 = vmatpush1.bf16.msra.mxu0 0
        %1389 = vmatprep.subr.bf16.mxu0 0
        %1390 = vmatpush1.bf16.msra.mxu0 0
        %1391 = vmatprep.subr.bf16.mxu0 0
        %1392 = vmatpush1.bf16.msra.mxu0 0
        %1393 = vmatprep.subr.bf16.mxu0 0
        %1394 = vmatpush1.bf16.msra.mxu0 0
        %1395 = vmatprep.subr.bf16.mxu0 0
        %1396 = vmatpush1.bf16.msra.mxu0 %v360
        %1397 = vmatprep.subr.bf16.mxu0 0
        %1398 = vmatpush2.bf16.msra.mxu0 0
        %1399 = vmatprep.subr.bf16.mxu0 0
        %1400 = vmatpush2.bf16.msra.mxu0 0
        %1401 = vmatprep.subr.bf16.mxu0 0
        %1402 = vmatpush2.bf16.msra.mxu0 0
        %1403 = vmatprep.subr.bf16.mxu0 0
        %1404 = vmatpush2.bf16.msra.mxu0 0
        %1405 = vmatprep.subr.bf16.mxu0 0
        %1406 = vmatpush2.bf16.msra.mxu0 0
        %1407 = vmatprep.subr.bf16.mxu0 0
        %1408 = vmatpush2.bf16.msra.mxu0 0
        %1409 = vmatprep.subr.bf16.mxu0 0
        %1410 = vmatpush2.bf16.msra.mxu0 0
        %1411 = vmatprep.subr.bf16.mxu0 0
        %1412 = vmatpush2.bf16.msra.mxu0 0
        %1413 = vmatprep.mubr.bf16.mxu0 0
        %1414 = vmatmul.mubr.bf16.gmra.mxu0 %v1370
        %v1415 = vpop.f32.mrf.mxu0
        %v1416 = vadd.f32 0.0, %v1415
        %v1417 = vpop.f32.mrf.mxu0
        %v1418 = vpop.f32.mrf.mxu0
        %v1419 = vadd.f32 0.0, %v1418
        %v1420 = vpop.f32.mrf.mxu0
        %1421 = vmatprep.mubr.bf16.mxu0 0
        %1422 = vmatmul.mubr.bf16.gmra.mxu0 %v1373
        %v1423 = vpop.f32.mrf.mxu0
        %v1424 = vadd.f32 0.0, %v1423
        %v1425 = vpop.f32.mrf.mxu0
        %v1426 = vpop.f32.mrf.mxu0
        %v1427 = vadd.f32 0.0, %v1426
        %v1428 = vpop.f32.mrf.mxu0
        %1429 = vmatprep.mubr.bf16.mxu0 0
        %1430 = vmatmul.mubr.bf16.gmra.mxu0 %v1376
        %v1431 = vpop.f32.mrf.mxu0
        %v1432 = vadd.f32 0.0, %v1431
        %v1433 = vpop.f32.mrf.mxu0
        %v1434 = vpop.f32.mrf.mxu0
        %v1435 = vadd.f32 0.0, %v1434
        %v1436 = vpop.f32.mrf.mxu0
        %1437 = vmatprep.mubr.bf16.mxu0 0
        %1438 = vmatmul.mubr.bf16.gmra.mxu0 %v1379
        %v1439 = vpop.f32.mrf.mxu0
        %v1440 = vadd.f32 0.0, %v1439
        %v1441 = vpop.f32.mrf.mxu0
        %v1442 = vpop.f32.mrf.mxu0
        %v1443 = vadd.f32 0.0, %v1442
        %v1444 = vpop.f32.mrf.mxu0
        %1445 = vdwg.mxu0
        %1446 = vmatprep.subr.bf16.mxu0 0
        %1447 = vmatpush1.bf16.msra.mxu0 0
        %1448 = vmatprep.subr.bf16.mxu0 0
        %1449 = vmatpush1.bf16.msra.mxu0 0
        %1450 = vmatprep.subr.bf16.mxu0 0
        %1451 = vmatpush1.bf16.msra.mxu0 0
        %1452 = vmatprep.subr.bf16.mxu0 0
        %1453 = vmatpush1.bf16.msra.mxu0 0
        %1454 = vmatprep.subr.bf16.mxu0 0
        %1455 = vmatpush1.bf16.msra.mxu0 0
        %1456 = vmatprep.subr.bf16.mxu0 0
        %1457 = vmatpush1.bf16.msra.mxu0 0
        %1458 = vmatprep.subr.bf16.mxu0 0
        %1459 = vmatpush1.bf16.msra.mxu0 0
        %1460 = vmatprep.subr.bf16.mxu0 0
        %1461 = vmatpush1.bf16.msra.mxu0 %v443
        %1462 = vmatprep.subr.bf16.mxu0 0
        %1463 = vmatpush2.bf16.msra.mxu0 0
        %1464 = vmatprep.subr.bf16.mxu0 0
        %1465 = vmatpush2.bf16.msra.mxu0 0
        %1466 = vmatprep.subr.bf16.mxu0 0
        %1467 = vmatpush2.bf16.msra.mxu0 0
        %1468 = vmatprep.subr.bf16.mxu0 0
        %1469 = vmatpush2.bf16.msra.mxu0 0
        %1470 = vmatprep.subr.bf16.mxu0 0
        %1471 = vmatpush2.bf16.msra.mxu0 0
        %1472 = vmatprep.subr.bf16.mxu0 0
        %1473 = vmatpush2.bf16.msra.mxu0 0
        %1474 = vmatprep.subr.bf16.mxu0 0
        %1475 = vmatpush2.bf16.msra.mxu0 0
        %1476 = vmatprep.subr.bf16.mxu0 0
        %1477 = vmatpush2.bf16.msra.mxu0 0
        %1478 = vmatprep.mubr.bf16.mxu0 0
        %1479 = vmatmul.mubr.bf16.gmra.mxu0 %v1370
        %v1480 = vpop.f32.mrf.mxu0
        %v1481 = vadd.f32 %v1416, %v1480
        %v1482 = vpop.f32.mrf.mxu0
        %v1483 = vpop.f32.mrf.mxu0
        %v1484 = vadd.f32 %v1419, %v1483
        %v1485 = vpop.f32.mrf.mxu0
        %1486 = vmatprep.mubr.bf16.mxu0 0
        %1487 = vmatmul.mubr.bf16.gmra.mxu0 %v1373
        %v1488 = vpop.f32.mrf.mxu0
        %v1489 = vadd.f32 %v1424, %v1488
        %v1490 = vpop.f32.mrf.mxu0
        %v1491 = vpop.f32.mrf.mxu0
        %v1492 = vadd.f32 %v1427, %v1491
        %v1493 = vpop.f32.mrf.mxu0
        %1494 = vmatprep.mubr.bf16.mxu0 0
        %1495 = vmatmul.mubr.bf16.gmra.mxu0 %v1376
        %v1496 = vpop.f32.mrf.mxu0
        %v1497 = vadd.f32 %v1432, %v1496
        %v1498 = vpop.f32.mrf.mxu0
        %v1499 = vpop.f32.mrf.mxu0
        %v1500 = vadd.f32 %v1435, %v1499
        %v1501 = vpop.f32.mrf.mxu0
        %1502 = vmatprep.mubr.bf16.mxu0 0
        %1503 = vmatmul.mubr.bf16.gmra.mxu0 %v1379
        %v1504 = vpop.f32.mrf.mxu0
        %v1505 = vadd.f32 %v1440, %v1504
        %v1506 = vpop.f32.mrf.mxu0
        %v1507 = vpop.f32.mrf.mxu0
        %v1508 = vadd.f32 %v1443, %v1507
        %v1509 = vpop.f32.mrf.mxu0
        %1510 = vdwg.mxu0
        %v1511 = vpack.c.bf16 %v1484, %v1481
        %v1512 = vpack.c.bf16 %v1492, %v1489
        %v1513 = vpack.c.bf16 %v1500, %v1497
        %v1514 = vpack.c.bf16 %v1508, %v1505
        %1515 = vmatprep.subr.bf16.mxu0 0
        %1516 = vmatpush1.bf16.msra.mxu0 0
        %1517 = vmatprep.subr.bf16.mxu0 0
        %1518 = vmatpush1.bf16.msra.mxu0 0
        %1519 = vmatprep.subr.bf16.mxu0 0
        %1520 = vmatpush1.bf16.msra.mxu0 0
        %1521 = vmatprep.subr.bf16.mxu0 0
        %1522 = vmatpush1.bf16.msra.mxu0 0
        %1523 = vmatprep.subr.bf16.mxu0 0
        %1524 = vmatpush1.bf16.msra.mxu0 %v1514
        %1525 = vmatprep.subr.bf16.mxu0 0
        %1526 = vmatpush1.bf16.msra.mxu0 %v1513
        %1527 = vmatprep.subr.bf16.mxu0 0
        %1528 = vmatpush1.bf16.msra.mxu0 %v1512
        %1529 = vmatprep.subr.bf16.mxu0 0
        %1530 = vmatpush1.bf16.msra.mxu0 %v1511
        %1531 = vmatprep.subr.bf16.mxu0 0
        %1532 = vmatpush2.bf16.msra.mxu0 0
        %1533 = vmatprep.subr.bf16.mxu0 0
        %1534 = vmatpush2.bf16.msra.mxu0 0
        %1535 = vmatprep.subr.bf16.mxu0 0
        %1536 = vmatpush2.bf16.msra.mxu0 0
        %1537 = vmatprep.subr.bf16.mxu0 0
        %1538 = vmatpush2.bf16.msra.mxu0 0
        %1539 = vmatprep.subr.bf16.mxu0 0
        %1540 = vmatpush2.bf16.msra.mxu0 0
        %1541 = vmatprep.subr.bf16.mxu0 0
        %1542 = vmatpush2.bf16.msra.mxu0 0
        %1543 = vmatprep.subr.bf16.mxu0 0
        %1544 = vmatpush2.bf16.msra.mxu0 0
        %1545 = vmatprep.subr.bf16.mxu0 0
        %1546 = vmatpush2.bf16.msra.mxu0 0
        %1547 = vmatprep.mubr.bf16.mxu0 0
        %1548 = vmatmul.mubr.bf16.gmra.mxu0 %v536
        %v1549 = vpop.f32.mrf.mxu0
        %v1550 = vadd.f32 0.0, %v1549
        %v1551 = vpop.f32.mrf.mxu0
        %v1552 = vpop.f32.mrf.mxu0
        %v1553 = vadd.f32 0.0, %v1552
        %v1554 = vpop.f32.mrf.mxu0
        %1555 = vmatprep.mubr.bf16.mxu0 0
        %1556 = vmatmul.mubr.bf16.gmra.mxu0 %v539
        %v1557 = vpop.f32.mrf.mxu0
        %v1558 = vadd.f32 0.0, %v1557
        %v1559 = vpop.f32.mrf.mxu0
        %v1560 = vpop.f32.mrf.mxu0
        %v1561 = vadd.f32 0.0, %v1560
        %v1562 = vpop.f32.mrf.mxu0
        %1563 = vmatprep.mubr.bf16.mxu0 0
        %1564 = vmatmul.mubr.bf16.gmra.mxu0 %v542
        %v1565 = vpop.f32.mrf.mxu0
        %v1566 = vadd.f32 0.0, %v1565
        %v1567 = vpop.f32.mrf.mxu0
        %v1568 = vpop.f32.mrf.mxu0
        %v1569 = vadd.f32 0.0, %v1568
        %v1570 = vpop.f32.mrf.mxu0
        %1571 = vmatprep.mubr.bf16.mxu0 0
        %1572 = vmatmul.mubr.bf16.gmra.mxu0 %v545
        %v1573 = vpop.f32.mrf.mxu0
        %v1574 = vadd.f32 0.0, %v1573
        %v1575 = vpop.f32.mrf.mxu0
        %v1576 = vpop.f32.mrf.mxu0
        %v1577 = vadd.f32 0.0, %v1576
        %v1578 = vpop.f32.mrf.mxu0
        %1579 = vdwg.mxu0
        %1580 = vmatprep.subr.bf16.mxu0 0
        %1581 = vmatpush1.bf16.msra.mxu0 0
        %1582 = vmatprep.subr.bf16.mxu0 0
        %1583 = vmatpush1.bf16.msra.mxu0 0
        %1584 = vmatprep.subr.bf16.mxu0 0
        %1585 = vmatpush1.bf16.msra.mxu0 0
        %1586 = vmatprep.subr.bf16.mxu0 0
        %1587 = vmatpush1.bf16.msra.mxu0 0
        %1588 = vmatprep.subr.bf16.mxu0 0
        %1589 = vmatpush1.bf16.msra.mxu0 %v1514
        %1590 = vmatprep.subr.bf16.mxu0 0
        %1591 = vmatpush1.bf16.msra.mxu0 %v1513
        %1592 = vmatprep.subr.bf16.mxu0 0
        %1593 = vmatpush1.bf16.msra.mxu0 %v1512
        %1594 = vmatprep.subr.bf16.mxu0 0
        %1595 = vmatpush1.bf16.msra.mxu0 %v1511
        %1596 = vmatprep.subr.bf16.mxu0 0
        %1597 = vmatpush2.bf16.msra.mxu0 0
        %1598 = vmatprep.subr.bf16.mxu0 0
        %1599 = vmatpush2.bf16.msra.mxu0 0
        %1600 = vmatprep.subr.bf16.mxu0 0
        %1601 = vmatpush2.bf16.msra.mxu0 0
        %1602 = vmatprep.subr.bf16.mxu0 0
        %1603 = vmatpush2.bf16.msra.mxu0 0
        %1604 = vmatprep.subr.bf16.mxu0 0
        %1605 = vmatpush2.bf16.msra.mxu0 0
        %1606 = vmatprep.subr.bf16.mxu0 0
        %1607 = vmatpush2.bf16.msra.mxu0 0
        %1608 = vmatprep.subr.bf16.mxu0 0
        %1609 = vmatpush2.bf16.msra.mxu0 0
        %1610 = vmatprep.subr.bf16.mxu0 0
        %1611 = vmatpush2.bf16.msra.mxu0 0
        %1612 = vmatprep.mubr.bf16.mxu0 0
        %1613 = vmatmul.mubr.bf16.gmra.mxu0 %v633
        %v1614 = vpop.f32.mrf.mxu0
        %v1615 = vadd.f32 %v1550, %v1614
        %v1616 = vpop.f32.mrf.mxu0
        %v1617 = vpop.f32.mrf.mxu0
        %v1618 = vadd.f32 %v1553, %v1617
        %v1619 = vpop.f32.mrf.mxu0
        %1620 = vmatprep.mubr.bf16.mxu0 0
        %1621 = vmatmul.mubr.bf16.gmra.mxu0 %v636
        %v1622 = vpop.f32.mrf.mxu0
        %v1623 = vadd.f32 %v1558, %v1622
        %v1624 = vpop.f32.mrf.mxu0
        %v1625 = vpop.f32.mrf.mxu0
        %v1626 = vadd.f32 %v1561, %v1625
        %v1627 = vpop.f32.mrf.mxu0
        %1628 = vmatprep.mubr.bf16.mxu0 0
        %1629 = vmatmul.mubr.bf16.gmra.mxu0 %v639
        %v1630 = vpop.f32.mrf.mxu0
        %v1631 = vadd.f32 %v1566, %v1630
        %v1632 = vpop.f32.mrf.mxu0
        %v1633 = vpop.f32.mrf.mxu0
        %v1634 = vadd.f32 %v1569, %v1633
        %v1635 = vpop.f32.mrf.mxu0
        %1636 = vmatprep.mubr.bf16.mxu0 0
        %1637 = vmatmul.mubr.bf16.gmra.mxu0 %v642
        %v1638 = vpop.f32.mrf.mxu0
        %v1639 = vadd.f32 %v1574, %v1638
        %v1640 = vpop.f32.mrf.mxu0
        %v1641 = vpop.f32.mrf.mxu0
        %v1642 = vadd.f32 %v1577, %v1641
        %v1643 = vpop.f32.mrf.mxu0
        %1644 = vdwg.mxu0
        %v1645 = vmul.f32 %v283, %v283
        %v1646 = vmul.f32 %v284, %v284
        %v1647 = vmul.f32 %v285, %v285
        %v1648 = vmul.f32 %v286, %v286
        %v1649 = vmul.f32 %v287, %v287
        %v1650 = vmul.f32 %v288, %v288
        %v1651 = vmul.f32 %v289, %v289
        %v1652 = vmul.f32 %v290, %v290
        %v1653 = vpack.c.bf16 %v1646, %v1645
        %v1654 = vpack.c.bf16 %v1648, %v1647
        %v1655 = vpack.c.bf16 %v1650, %v1649
        %v1656 = vpack.c.bf16 %v1652, %v1651
        %v1658 = vsel %vm327, %v1653, 0
        %v1661 = vsel %vm327, %v1654, 0
        %v1664 = vsel %vm327, %v1655, 0
        %v1667 = vsel %vm327, %v1656, 0
        %1669 = vmatprep.subr.bf16.mxu0 0
        %1670 = vmatpush1.bf16.msra.mxu0 0
        %1671 = vmatprep.subr.bf16.mxu0 0
        %1672 = vmatpush1.bf16.msra.mxu0 0
        %1673 = vmatprep.subr.bf16.mxu0 0
        %1674 = vmatpush1.bf16.msra.mxu0 0
        %1675 = vmatprep.subr.bf16.mxu0 0
        %1676 = vmatpush1.bf16.msra.mxu0 0
        %1677 = vmatprep.subr.bf16.mxu0 0
        %1678 = vmatpush1.bf16.msra.mxu0 0
        %1679 = vmatprep.subr.bf16.mxu0 0
        %1680 = vmatpush1.bf16.msra.mxu0 0
        %1681 = vmatprep.subr.bf16.mxu0 0
        %1682 = vmatpush1.bf16.msra.mxu0 0
        %1683 = vmatprep.subr.bf16.mxu0 0
        %1684 = vmatpush1.bf16.msra.mxu0 %v360
        %1685 = vmatprep.subr.bf16.mxu0 0
        %1686 = vmatpush2.bf16.msra.mxu0 0
        %1687 = vmatprep.subr.bf16.mxu0 0
        %1688 = vmatpush2.bf16.msra.mxu0 0
        %1689 = vmatprep.subr.bf16.mxu0 0
        %1690 = vmatpush2.bf16.msra.mxu0 0
        %1691 = vmatprep.subr.bf16.mxu0 0
        %1692 = vmatpush2.bf16.msra.mxu0 0
        %1693 = vmatprep.subr.bf16.mxu0 0
        %1694 = vmatpush2.bf16.msra.mxu0 0
        %1695 = vmatprep.subr.bf16.mxu0 0
        %1696 = vmatpush2.bf16.msra.mxu0 0
        %1697 = vmatprep.subr.bf16.mxu0 0
        %1698 = vmatpush2.bf16.msra.mxu0 0
        %1699 = vmatprep.subr.bf16.mxu0 0
        %1700 = vmatpush2.bf16.msra.mxu0 0
        %1701 = vmatprep.mubr.bf16.mxu0 0
        %1702 = vmatmul.mubr.bf16.gmra.mxu0 %v1658
        %v1703 = vpop.f32.mrf.mxu0
        %v1704 = vadd.f32 0.0, %v1703
        %v1705 = vpop.f32.mrf.mxu0
        %v1706 = vpop.f32.mrf.mxu0
        %v1707 = vadd.f32 0.0, %v1706
        %v1708 = vpop.f32.mrf.mxu0
        %1709 = vmatprep.mubr.bf16.mxu0 0
        %1710 = vmatmul.mubr.bf16.gmra.mxu0 %v1661
        %v1711 = vpop.f32.mrf.mxu0
        %v1712 = vadd.f32 0.0, %v1711
        %v1713 = vpop.f32.mrf.mxu0
        %v1714 = vpop.f32.mrf.mxu0
        %v1715 = vadd.f32 0.0, %v1714
        %v1716 = vpop.f32.mrf.mxu0
        %1717 = vmatprep.mubr.bf16.mxu0 0
        %1718 = vmatmul.mubr.bf16.gmra.mxu0 %v1664
        %v1719 = vpop.f32.mrf.mxu0
        %v1720 = vadd.f32 0.0, %v1719
        %v1721 = vpop.f32.mrf.mxu0
        %v1722 = vpop.f32.mrf.mxu0
        %v1723 = vadd.f32 0.0, %v1722
        %v1724 = vpop.f32.mrf.mxu0
        %1725 = vmatprep.mubr.bf16.mxu0 0
        %1726 = vmatmul.mubr.bf16.gmra.mxu0 %v1667
        %v1727 = vpop.f32.mrf.mxu0
        %v1728 = vadd.f32 0.0, %v1727
        %v1729 = vpop.f32.mrf.mxu0
        %v1730 = vpop.f32.mrf.mxu0
        %v1731 = vadd.f32 0.0, %v1730
        %v1732 = vpop.f32.mrf.mxu0
        %1733 = vdwg.mxu0
        %1734 = vmatprep.subr.bf16.mxu0 0
        %1735 = vmatpush1.bf16.msra.mxu0 0
        %1736 = vmatprep.subr.bf16.mxu0 0
        %1737 = vmatpush1.bf16.msra.mxu0 0
        %1738 = vmatprep.subr.bf16.mxu0 0
        %1739 = vmatpush1.bf16.msra.mxu0 0
        %1740 = vmatprep.subr.bf16.mxu0 0
        %1741 = vmatpush1.bf16.msra.mxu0 0
        %1742 = vmatprep.subr.bf16.mxu0 0
        %1743 = vmatpush1.bf16.msra.mxu0 0
        %1744 = vmatprep.subr.bf16.mxu0 0
        %1745 = vmatpush1.bf16.msra.mxu0 0
        %1746 = vmatprep.subr.bf16.mxu0 0
        %1747 = vmatpush1.bf16.msra.mxu0 0
        %1748 = vmatprep.subr.bf16.mxu0 0
        %1749 = vmatpush1.bf16.msra.mxu0 %v443
        %1750 = vmatprep.subr.bf16.mxu0 0
        %1751 = vmatpush2.bf16.msra.mxu0 0
        %1752 = vmatprep.subr.bf16.mxu0 0
        %1753 = vmatpush2.bf16.msra.mxu0 0
        %1754 = vmatprep.subr.bf16.mxu0 0
        %1755 = vmatpush2.bf16.msra.mxu0 0
        %1756 = vmatprep.subr.bf16.mxu0 0
        %1757 = vmatpush2.bf16.msra.mxu0 0
        %1758 = vmatprep.subr.bf16.mxu0 0
        %1759 = vmatpush2.bf16.msra.mxu0 0
        %1760 = vmatprep.subr.bf16.mxu0 0
        %1761 = vmatpush2.bf16.msra.mxu0 0
        %1762 = vmatprep.subr.bf16.mxu0 0
        %1763 = vmatpush2.bf16.msra.mxu0 0
        %1764 = vmatprep.subr.bf16.mxu0 0
        %1765 = vmatpush2.bf16.msra.mxu0 0
        %1766 = vmatprep.mubr.bf16.mxu0 0
        %1767 = vmatmul.mubr.bf16.gmra.mxu0 %v1658
        %v1768 = vpop.f32.mrf.mxu0
        %v1769 = vadd.f32 %v1704, %v1768
        %v1770 = vpop.f32.mrf.mxu0
        %v1771 = vpop.f32.mrf.mxu0
        %v1772 = vadd.f32 %v1707, %v1771
        %v1773 = vpop.f32.mrf.mxu0
        %1774 = vmatprep.mubr.bf16.mxu0 0
        %1775 = vmatmul.mubr.bf16.gmra.mxu0 %v1661
        %v1776 = vpop.f32.mrf.mxu0
        %v1777 = vadd.f32 %v1712, %v1776
        %v1778 = vpop.f32.mrf.mxu0
        %v1779 = vpop.f32.mrf.mxu0
        %v1780 = vadd.f32 %v1715, %v1779
        %v1781 = vpop.f32.mrf.mxu0
        %1782 = vmatprep.mubr.bf16.mxu0 0
        %1783 = vmatmul.mubr.bf16.gmra.mxu0 %v1664
        %v1784 = vpop.f32.mrf.mxu0
        %v1785 = vadd.f32 %v1720, %v1784
        %v1786 = vpop.f32.mrf.mxu0
        %v1787 = vpop.f32.mrf.mxu0
        %v1788 = vadd.f32 %v1723, %v1787
        %v1789 = vpop.f32.mrf.mxu0
        %1790 = vmatprep.mubr.bf16.mxu0 0
        %1791 = vmatmul.mubr.bf16.gmra.mxu0 %v1667
        %v1792 = vpop.f32.mrf.mxu0
        %v1793 = vadd.f32 %v1728, %v1792
        %v1794 = vpop.f32.mrf.mxu0
        %v1795 = vpop.f32.mrf.mxu0
        %v1796 = vadd.f32 %v1731, %v1795
        %v1797 = vpop.f32.mrf.mxu0
        %1798 = vdwg.mxu0
        %v1799 = vpack.c.bf16 %v1772, %v1769
        %v1800 = vpack.c.bf16 %v1780, %v1777
        %v1801 = vpack.c.bf16 %v1788, %v1785
        %v1802 = vpack.c.bf16 %v1796, %v1793
        %1803 = vmatprep.subr.bf16.mxu0 0
        %1804 = vmatpush1.bf16.msra.mxu0 0
        %1805 = vmatprep.subr.bf16.mxu0 0
        %1806 = vmatpush1.bf16.msra.mxu0 0
        %1807 = vmatprep.subr.bf16.mxu0 0
        %1808 = vmatpush1.bf16.msra.mxu0 0
        %1809 = vmatprep.subr.bf16.mxu0 0
        %1810 = vmatpush1.bf16.msra.mxu0 0
        %1811 = vmatprep.subr.bf16.mxu0 0
        %1812 = vmatpush1.bf16.msra.mxu0 %v1802
        %1813 = vmatprep.subr.bf16.mxu0 0
        %1814 = vmatpush1.bf16.msra.mxu0 %v1801
        %1815 = vmatprep.subr.bf16.mxu0 0
        %1816 = vmatpush1.bf16.msra.mxu0 %v1800
        %1817 = vmatprep.subr.bf16.mxu0 0
        %1818 = vmatpush1.bf16.msra.mxu0 %v1799
        %1819 = vmatprep.subr.bf16.mxu0 0
        %1820 = vmatpush2.bf16.msra.mxu0 0
        %1821 = vmatprep.subr.bf16.mxu0 0
        %1822 = vmatpush2.bf16.msra.mxu0 0
        %1823 = vmatprep.subr.bf16.mxu0 0
        %1824 = vmatpush2.bf16.msra.mxu0 0
        %1825 = vmatprep.subr.bf16.mxu0 0
        %1826 = vmatpush2.bf16.msra.mxu0 0
        %1827 = vmatprep.subr.bf16.mxu0 0
        %1828 = vmatpush2.bf16.msra.mxu0 0
        %1829 = vmatprep.subr.bf16.mxu0 0
        %1830 = vmatpush2.bf16.msra.mxu0 0
        %1831 = vmatprep.subr.bf16.mxu0 0
        %1832 = vmatpush2.bf16.msra.mxu0 0
        %1833 = vmatprep.subr.bf16.mxu0 0
        %1834 = vmatpush2.bf16.msra.mxu0 0
        %1835 = vmatprep.mubr.bf16.mxu0 0
        %1836 = vmatmul.mubr.bf16.gmra.mxu0 %v536
        %v1837 = vpop.f32.mrf.mxu0
        %v1838 = vadd.f32 0.0, %v1837
        %v1839 = vpop.f32.mrf.mxu0
        %v1840 = vpop.f32.mrf.mxu0
        %v1841 = vadd.f32 0.0, %v1840
        %v1842 = vpop.f32.mrf.mxu0
        %1843 = vmatprep.mubr.bf16.mxu0 0
        %1844 = vmatmul.mubr.bf16.gmra.mxu0 %v539
        %v1845 = vpop.f32.mrf.mxu0
        %v1846 = vadd.f32 0.0, %v1845
        %v1847 = vpop.f32.mrf.mxu0
        %v1848 = vpop.f32.mrf.mxu0
        %v1849 = vadd.f32 0.0, %v1848
        %v1850 = vpop.f32.mrf.mxu0
        %1851 = vmatprep.mubr.bf16.mxu0 0
        %1852 = vmatmul.mubr.bf16.gmra.mxu0 %v542
        %v1853 = vpop.f32.mrf.mxu0
        %v1854 = vadd.f32 0.0, %v1853
        %v1855 = vpop.f32.mrf.mxu0
        %v1856 = vpop.f32.mrf.mxu0
        %v1857 = vadd.f32 0.0, %v1856
        %v1858 = vpop.f32.mrf.mxu0
        %1859 = vmatprep.mubr.bf16.mxu0 0
        %1860 = vmatmul.mubr.bf16.gmra.mxu0 %v545
        %v1861 = vpop.f32.mrf.mxu0
        %v1862 = vadd.f32 0.0, %v1861
        %v1863 = vpop.f32.mrf.mxu0
        %v1864 = vpop.f32.mrf.mxu0
        %v1865 = vadd.f32 0.0, %v1864
        %v1866 = vpop.f32.mrf.mxu0
        %1867 = vdwg.mxu0
        %1868 = vmatprep.subr.bf16.mxu0 0
        %1869 = vmatpush1.bf16.msra.mxu0 0
        %1870 = vmatprep.subr.bf16.mxu0 0
        %1871 = vmatpush1.bf16.msra.mxu0 0
        %1872 = vmatprep.subr.bf16.mxu0 0
        %1873 = vmatpush1.bf16.msra.mxu0 0
        %1874 = vmatprep.subr.bf16.mxu0 0
        %1875 = vmatpush1.bf16.msra.mxu0 0
        %1876 = vmatprep.subr.bf16.mxu0 0
        %1877 = vmatpush1.bf16.msra.mxu0 %v1802
        %1878 = vmatprep.subr.bf16.mxu0 0
        %1879 = vmatpush1.bf16.msra.mxu0 %v1801
        %1880 = vmatprep.subr.bf16.mxu0 0
        %1881 = vmatpush1.bf16.msra.mxu0 %v1800
        %1882 = vmatprep.subr.bf16.mxu0 0
        %1883 = vmatpush1.bf16.msra.mxu0 %v1799
        %1884 = vmatprep.subr.bf16.mxu0 0
        %1885 = vmatpush2.bf16.msra.mxu0 0
        %1886 = vmatprep.subr.bf16.mxu0 0
        %1887 = vmatpush2.bf16.msra.mxu0 0
        %1888 = vmatprep.subr.bf16.mxu0 0
        %1889 = vmatpush2.bf16.msra.mxu0 0
        %1890 = vmatprep.subr.bf16.mxu0 0
        %1891 = vmatpush2.bf16.msra.mxu0 0
        %1892 = vmatprep.subr.bf16.mxu0 0
        %1893 = vmatpush2.bf16.msra.mxu0 0
        %1894 = vmatprep.subr.bf16.mxu0 0
        %1895 = vmatpush2.bf16.msra.mxu0 0
        %1896 = vmatprep.subr.bf16.mxu0 0
        %1897 = vmatpush2.bf16.msra.mxu0 0
        %1898 = vmatprep.subr.bf16.mxu0 0
        %1899 = vmatpush2.bf16.msra.mxu0 0
        %1900 = vmatprep.mubr.bf16.mxu0 0
        %1901 = vmatmul.mubr.bf16.gmra.mxu0 %v633
        %v1902 = vpop.f32.mrf.mxu0
        %v1903 = vadd.f32 %v1838, %v1902
        %v1904 = vpop.f32.mrf.mxu0
        %v1905 = vpop.f32.mrf.mxu0
        %v1906 = vadd.f32 %v1841, %v1905
        %v1907 = vpop.f32.mrf.mxu0
        %1908 = vmatprep.mubr.bf16.mxu0 0
        %1909 = vmatmul.mubr.bf16.gmra.mxu0 %v636
        %v1910 = vpop.f32.mrf.mxu0
        %v1911 = vadd.f32 %v1846, %v1910
        %v1912 = vpop.f32.mrf.mxu0
        %v1913 = vpop.f32.mrf.mxu0
        %v1914 = vadd.f32 %v1849, %v1913
        %v1915 = vpop.f32.mrf.mxu0
        %1916 = vmatprep.mubr.bf16.mxu0 0
        %1917 = vmatmul.mubr.bf16.gmra.mxu0 %v639
        %v1918 = vpop.f32.mrf.mxu0
        %v1919 = vadd.f32 %v1854, %v1918
        %v1920 = vpop.f32.mrf.mxu0
        %v1921 = vpop.f32.mrf.mxu0
        %v1922 = vadd.f32 %v1857, %v1921
        %v1923 = vpop.f32.mrf.mxu0
        %1924 = vmatprep.mubr.bf16.mxu0 0
        %1925 = vmatmul.mubr.bf16.gmra.mxu0 %v642
        %v1926 = vpop.f32.mrf.mxu0
        %v1927 = vadd.f32 %v1862, %v1926
        %v1928 = vpop.f32.mrf.mxu0
        %v1929 = vpop.f32.mrf.mxu0
        %v1930 = vadd.f32 %v1865, %v1929
        %v1931 = vpop.f32.mrf.mxu0
        %1932 = vdwg.mxu0
        %v1933 = vadd.f32 %v1615, %v1903
        %v1934 = vadd.f32 %v1618, %v1906
        %v1935 = vadd.f32 %v1623, %v1911
        %v1936 = vadd.f32 %v1626, %v1914
        %v1937 = vadd.f32 %v1631, %v1919
        %v1938 = vadd.f32 %v1634, %v1922
        %v1939 = vadd.f32 %v1639, %v1927
        %v1940 = vadd.f32 %v1642, %v1930
        %v1941 = vsub.f32 %v1933, %v1013
        %v1942 = vsub.f32 %v1934, %v1014
        %v1943 = vsub.f32 %v1935, %v1015
        %v1944 = vsub.f32 %v1936, %v1016
        %v1945 = vsub.f32 %v1937, %v1017
        %v1946 = vsub.f32 %v1938, %v1018
        %v1947 = vsub.f32 %v1939, %v1019
        %v1948 = vsub.f32 %v1940, %v1020
        %v1949 = vadd.f32 %v1013, 0.0001
        %v1950 = vadd.f32 %v1014, 0.0001
        %v1951 = vadd.f32 %v1015, 0.0001
        %v1952 = vadd.f32 %v1016, 0.0001
        %v1953 = vadd.f32 %v1017, 0.0001
        %v1954 = vadd.f32 %v1018, 0.0001
        %v1955 = vadd.f32 %v1019, 0.0001
        %v1956 = vadd.f32 %v1020, 0.0001
        %v1957 = vadd.f32 %v1941, 0.0009
        %v1958 = vadd.f32 %v1942, 0.0009
        %v1959 = vadd.f32 %v1943, 0.0009
        %v1960 = vadd.f32 %v1944, 0.0009
        %v1961 = vadd.f32 %v1945, 0.0009
        %v1962 = vadd.f32 %v1946, 0.0009
        %v1963 = vadd.f32 %v1947, 0.0009
        %v1964 = vadd.f32 %v1948, 0.0009
        %v1965 = vmul.f32 %v1949, %v1957
        %v1966 = vmul.f32 %v1950, %v1958
        %v1967 = vmul.f32 %v1951, %v1959
        %v1968 = vmul.f32 %v1952, %v1960
        %v1969 = vmul.f32 %v1953, %v1961
        %v1970 = vmul.f32 %v1954, %v1962
        %v1971 = vmul.f32 %v1955, %v1963
        %v1972 = vmul.f32 %v1956, %v1964
        %v1973 = vrcp.pop %v1965
        %v1974 = vrcp.pop %v1966
        %v1975 = vrcp.pop %v1967
        %v1976 = vrcp.pop %v1968
        %v1977 = vrcp.pop %v1969
        %v1978 = vrcp.pop %v1970
        %v1979 = vrcp.pop %v1971
        %v1980 = vrcp.pop %v1972
        %v1981 = vmul.f32 %v1349, %v1973
        %v1982 = vmul.f32 %v1350, %v1974
        %v1983 = vmul.f32 %v1351, %v1975
        %v1984 = vmul.f32 %v1352, %v1976
        %v1985 = vmul.f32 %v1353, %v1977
        %v1986 = vmul.f32 %v1354, %v1978
        %v1987 = vmul.f32 %v1355, %v1979
        %v1988 = vmul.f32 %v1356, %v1980
        %v1989 = vsel %vm327, %v1981, 0.0
        %v1990 = vsel %vm327, %v1982, 0.0
        %v1991 = vadd.f32 %v1989, %v1990
        %v1992 = vsel %vm327, %v1983, 0.0
        %v1993 = vadd.f32 %v1991, %v1992
        %v1994 = vsel %vm327, %v1984, 0.0
        %v1995 = vadd.f32 %v1993, %v1994
        %v1996 = vsel %vm327, %v1985, 0.0
        %v1997 = vadd.f32 %v1995, %v1996
        %v1998 = vsel %vm327, %v1986, 0.0
        %v1999 = vadd.f32 %v1997, %v1998
        %v2000 = vsel %vm327, %v1987, 0.0
        %v2001 = vadd.f32 %v1999, %v2000
        %v2002 = vsel %vm327, %v1988, 0.0
        %v2003 = vadd.f32 %v2001, %v2002
        %2004 = vadd.xlane.f32.xlu0 %v2003
        %v2005 = vpop.xlane.xlu0 %2004
        %v2006 = vrot.slane %v2005, 4
        %v2007 = vadd.f32 %v2005, %v2006
        %v2008 = vrot.slane %v2007, 2
        %v2009 = vadd.f32 %v2007, %v2008
        %v2010 = vrot.slane %v2009, 1
        %v2011 = vadd.f32 %v2009, %v2010
        %s2012 = vtos %v2011
        %v2013 = vlaneseq
        %v2014 = vshrl.u32 %v2013, 7
        %vm2015 = vcmp.eq.s32.totalorder %v2014, 0
        %vm2016 = vcmp.eq.s32.totalorder %v2014, 1
        %v2017 = vstv %s2012
        %v2018 = vsel %vm2016, %v2017, 0.0
        %v2019 = vstv %s351
        %v2020 = vsel %vm2015, %v2019, %v2018
        %2021 = vst [vmem:[%s261] sm:$0xff] %v2020
        %s2022 = sand.u32 %s164, 1
        %s2023 = scalar_lea.sflag [#allocation3], %s2022
        %s2024 = sand.u32 %s164, 1
        %s2025 = smul.addr %s2024, 8
        %s2026 = scalar_lea.vmem [#allocation2], %s2025
        // Predicated region
        $region45: #{tpu_custom_call.1} parent=43 // pred_check
          %p2027 = pneg %p174
        $region46: #{tpu_custom_call.1} parent=43 // pred_check_branch
          %2029 = sbr.rel (%p2027) target = $region48
        $region47: #{tpu_custom_call.1} parent=43 // pred_region
          %s2031 = ssub.s32 128, 128
          %2032 = vsyncadd %s2023, %s2031
          %s2033 = smul.addr %s20, 128
          %s2034 = scalar_lea.hbm %s6, %s2033
          %s2036 = sshll.u32 %s2026, 4
          %s2037 = int_to_ptr.vmem [resolvable:$true] %s2036
          %2039 = dma.vmem_to_hbm [thread:$0]  %s2037, 128, %s2034, %s2023
        $region48: #{tpu_custom_call.1} parent=43 // pred_fallthru
          _
      $region44: #{tpu_custom_call.1} parent=5 // pred_fallthru
        _
      %p2040 = scmp.le.s32.totalorder 2, %s15
      // Predicated region
      $region49: #{tpu_custom_call.1} parent=5 // pred_check
        %p2041 = pneg %p2040
      $region50: #{tpu_custom_call.1} parent=5 // pred_check_branch
        %2043 = sbr.rel (%p2041) target = $region52
      $region51: #{tpu_custom_call.1} parent=5 // pred_region
        %s2044 = ssub.s32 %s15, 2
        // Predicated region
        $region53: #{tpu_custom_call.1} parent=51 // pred_check
          %p2045 = pneg %p180
        $region54: #{tpu_custom_call.1} parent=51 // pred_check_branch
          %2047 = sbr.rel (%p2045) target = $region56
        $region55: #{tpu_custom_call.1} parent=51 // pred_region
          %s2048 = sand.u32 %s165, 1
          %s2049 = scalar_lea.sflag [#allocation3], %s2048
          %s2050 = sand.u32 %s165, 1
          %s2051 = smul.addr %s2050, 8
          %s2052 = scalar_lea.vmem [#allocation2], %s2051
          %2053 = dma.done %s2049, 128
        $region56: #{tpu_custom_call.1} parent=51 // pred_fallthru
          _
      $region52: #{tpu_custom_call.1} parent=5 // pred_fallthru
        _
    $region6: #{tpu_custom_call.1} parent=1 // loop_footer
      %s19 = sadd.s32 1, %s15
    $region7: #{tpu_custom_call.1} parent=1 // loop_footer_branch
      %14 = sbr.rel target = $region3
    $region8: #{tpu_custom_call.1} parent=1 // loop_exit
      _
    %2054 = vsyncpa [#allocation3], 1
    %s2055 = scalar_lea.sflag [#allocation3], 1
    %2056 = vsyncpa %s2055, 1

</llo_original>
